<compile_context>
chip_gen: v5e
topology: v5e:2x2
jax: 0.10.0
libtpu: 0.0.40
codegen_flags: <defaults>
</compile_context>

<pallas_src>
import functools

import jax
import jax.numpy as jnp
from jax.experimental import pallas as pl
from jax.experimental.pallas import tpu as pltpu

LN_EPS = 1e-5


# ----------------------------------------------------------------------------
# Kernel
# ----------------------------------------------------------------------------
def state_encoder_kernel(
    x_ref,                    # (tm, Cin)   compute dtype, row-major tile
    w1_ref, w2_ref, w3_ref,   # (Cout, Cin), (Cout, Cout), (Cout, Cout)  compute dtype
    vec_ref,                  # (9, Cout) f32: [b1, g1, be1, b2, g2, be2, b3, g3, be3]
    o_ref,                    # (tm, Cout)  output dtype
):
    def linear_ln(x, w_ref, layer):
        # Linear on the MXU: (tm, K) contracted with (Cout, K) -> (tm, Cout), f32 acc.
        h = jax.lax.dot_general(
            x, w_ref[...],
            dimension_numbers=(((1,), (1,)), ((), ())),
            preferred_element_type=jnp.float32,
        )
        h = h + vec_ref[3 * layer: 3 * layer + 1, :]            # bias   (1, Cout)
        # Two-pass LayerNorm over the feature (lane) axis.
        mu = jnp.mean(h, axis=-1, keepdims=True)                # (tm, 1)
        d = h - mu
        var = jnp.mean(d * d, axis=-1, keepdims=True)           # (tm, 1)
        return (d * jax.lax.rsqrt(var + LN_EPS)
                * vec_ref[3 * layer + 1: 3 * layer + 2, :]      # gamma  (1, Cout)
                + vec_ref[3 * layer + 2: 3 * layer + 3, :])     # beta   (1, Cout)

    # Layer 1: Linear -> LayerNorm -> ReLU
    h = jnp.maximum(linear_ln(x_ref[...], w1_ref, 0), 0.0)
    # Layer 2: Linear -> LayerNorm -> ReLU
    h = jnp.maximum(linear_ln(h.astype(w2_ref.dtype), w2_ref, 1), 0.0)
    # Layer 3: Linear -> LayerNorm
    o_ref[...] = linear_ln(h.astype(w3_ref.dtype), w3_ref, 2).astype(o_ref.dtype)


# ----------------------------------------------------------------------------
# Parameters (matches init_weights: xavier_uniform linears, zero biases,
# LayerNorm weight=1 / bias=0).  Linear weights stored in PyTorch (out, in) layout;
# biases / LN params stored as (out_channel,) vectors.
# ----------------------------------------------------------------------------
def init_state_encoder_params(key, in_channel: int, out_channel: int):
    k1, k2, k3 = jax.random.split(key, 3)

    def xavier(k, fan_out, fan_in):
        bound = (6.0 / (fan_in + fan_out)) ** 0.5
        return jax.random.uniform(
            k, (fan_out, fan_in), jnp.float32, minval=-bound, maxval=bound
        )

    zeros = lambda: jnp.zeros((out_channel,), jnp.float32)
    ones = lambda: jnp.ones((out_channel,), jnp.float32)

    return {
        "w1": xavier(k1, out_channel, in_channel),
        "b1": zeros(), "g1": ones(), "be1": zeros(),
        "w2": xavier(k2, out_channel, out_channel),
        "b2": zeros(), "g2": ones(), "be2": zeros(),
        "w3": xavier(k3, out_channel, out_channel),
        "b3": zeros(), "g3": ones(), "be3": zeros(),
    }


def _round_up(x: int, n: int) -> int:
    return ((x + n - 1) // n) * n


def _vmem_capacity_bytes() -> int:
    try:
        return int(pltpu.get_tpu_info().vmem_capacity_bytes)
    except Exception:
        return 64 * 1024 * 1024      # conservative: v7x per-TensorCore VMEM


# ----------------------------------------------------------------------------
# Wrapper
# ----------------------------------------------------------------------------
@functools.partial(jax.jit, static_argnames=("row_tile",))
def state_encoder(x, params, *, row_tile: int = 8192):
    """x: (..., in_channel) -> (..., out_channel)."""
    in_channel = x.shape[-1]
    out_channel = params["w1"].shape[0]
    lead_shape = x.shape[:-1]

    # bf16 MXU operands when the caller is bf16 (v6e/v7x native); f32 otherwise.
    compute_dtype = jnp.bfloat16 if x.dtype == jnp.bfloat16 else jnp.float32
    in_dsize = jnp.dtype(compute_dtype).itemsize
    out_dsize = jnp.dtype(x.dtype).itemsize

    x2d = x.reshape(-1, in_channel).astype(compute_dtype)    # no-op cast for f32/bf16
    m = x2d.shape[0]

    # ---- generation-aware VMEM limit / tile budget -------------------------
    vmem_cap = _vmem_capacity_bytes()
    vmem_limit = max(32 * 1024 * 1024,
                     min(vmem_cap - 16 * 1024 * 1024, 100 * 1024 * 1024))
    tile_budget = vmem_limit // 2

    param_bytes = (in_dsize * out_channel * (in_channel + 2 * out_channel)
                   + 4 * 9 * out_channel)

    # Per-row VMEM cost: double-buffered x/out tiles + ~4 live (tm, Cout) f32
    # intermediates + per-row LN statistics.
    per_row = (2 * in_channel * in_dsize
               + 2 * out_channel * out_dsize
               + 4 * out_channel * 4
               + 2 * 4)
    tm_budget = max(128, ((tile_budget - 2 * param_bytes) // per_row) // 128 * 128)

    tm = max(128, min(_round_up(m, 128), tm_budget,
                      max(128, _round_up(row_tile, 128))))

    # Keep at least 2 grid steps once m is reasonably large so ("parallel",)
    # can shard row tiles across both TensorCores on v7x.
    if m >= 4096:
        tm = min(tm, _round_up(-(-m // 2), 128))

    grid = (pl.cdiv(m, tm),)

    # ---- parameters ---------------------------------------------------------
    w1 = params["w1"].astype(compute_dtype)
    w2 = params["w2"].astype(compute_dtype)
    w3 = params["w3"].astype(compute_dtype)
    vec = jnp.stack(
        [params["b1"], params["g1"], params["be1"],
         params["b2"], params["g2"], params["be2"],
         params["b3"], params["g3"], params["be3"]], axis=0
    ).astype(jnp.float32)                                     # (9, Cout)

    cost = pl.CostEstimate(
        flops=int(2 * m * out_channel * (in_channel + 2 * out_channel)),
        transcendentals=int(3 * m),
        bytes_accessed=int(m * in_channel * in_dsize
                           + m * out_channel * out_dsize
                           + param_bytes),
    )

    out = pl.pallas_call(
        state_encoder_kernel,
        out_shape=jax.ShapeDtypeStruct((m, out_channel), x.dtype),
        grid=grid,
        in_specs=[
            pl.BlockSpec((tm, in_channel), lambda i: (i, 0)),
            pl.BlockSpec(w1.shape, lambda i: (0, 0)),
            pl.BlockSpec(w2.shape, lambda i: (0, 0)),
            pl.BlockSpec(w3.shape, lambda i: (0, 0)),
            pl.BlockSpec(vec.shape, lambda i: (0, 0)),
        ],
        out_specs=pl.BlockSpec((tm, out_channel), lambda i: (i, 0)),
        compiler_params=pltpu.CompilerParams(
            dimension_semantics=("parallel",),
            vmem_limit_bytes=int(vmem_limit),
        ),
        cost_estimate=cost,
    )(x2d, w1, w2, w3, vec)

    return out.reshape(*lead_shape, out_channel)


# ----------------------------------------------------------------------------
# Pure-JAX reference (sanity check)
# ----------------------------------------------------------------------------
def _reference(x, params):
    def ln(h, g, b):
        mu = jnp.mean(h, axis=-1, keepdims=True)
        var = jnp.mean((h - mu) ** 2, axis=-1, keepdims=True)
        return (h - mu) * jax.lax.rsqrt(var + LN_EPS) * g + b

    h = x @ params["w1"].T + params["b1"]
    h = jnp.maximum(ln(h, params["g1"], params["be1"]), 0.0)
    h = h @ params["w2"].T + params["b2"]
    h = jnp.maximum(ln(h, params["g2"], params["be2"]), 0.0)
    h = h @ params["w3"].T + params["b3"]
    return ln(h, params["g3"], params["be3"])


if __name__ == "__main__":
    key = jax.random.PRNGKey(0)
    k_x, k_x2, k_x3, k_p, k_r = jax.random.split(key, 5)

    batch, seq, in_channel, out_channel = 2, 8, 4, 32
    params = init_state_encoder_params(k_p, in_channel, out_channel)

    # Small case (single grid step, heavily partial trailing block).
    x = jax.random.normal(k_x, (batch, seq, in_channel), dtype=jnp.float32)
    y = jax.block_until_ready(state_encoder(x, params))
    y_ref = _reference(x, params)
    assert y.shape == (batch, seq, out_channel), y.shape
    assert jnp.allclose(y, y_ref, atol=1e-4, rtol=1e-4), float(jnp.max(jnp.abs(y - y_ref)))

    # Non-tile-multiple row count (single step, partial block).
    x2 = jax.random.normal(k_x2, (3, 1000, in_channel), dtype=jnp.float32)
    y2 = jax.block_until_ready(state_encoder(x2, params))
    y2_ref = _reference(x2, params)
    assert y2.shape == (3, 1000, out_channel), y2.shape
    assert jnp.allclose(y2, y2_ref, atol=1e-4, rtol=1e-4), float(jnp.max(jnp.abs(y2 - y2_ref)))

    # Larger case: exercises the multi-step grid (>= 2 steps) + partial last block.
    x3 = jax.random.normal(k_x3, (4, 1200, in_channel), dtype=jnp.float32)
    y3 = jax.block_until_ready(state_encoder(x3, params))
    y3_ref = _reference(x3, params)
    assert y3.shape == (4, 1200, out_channel), y3.shape
    assert jnp.allclose(y3, y3_ref, atol=1e-4, rtol=1e-4), float(jnp.max(jnp.abs(y3 - y3_ref)))

    # Randomized (non-zero) biases / LN affine params: stricter numerics check.
    rkeys = jax.random.split(k_r, len(params))
    params_rand = {
        name: params[name] + 0.1 * jax.random.normal(rk, params[name].shape, jnp.float32)
        for rk, name in zip(rkeys, params)
    }
    y4 = jax.block_until_ready(state_encoder(x3, params_rand))
    y4_ref = _reference(x3, params_rand)
    assert jnp.allclose(y4, y4_ref, atol=1e-4, rtol=1e-4), float(jnp.max(jnp.abs(y4 - y4_ref)))

    # bf16 smoke test (bf16 HBM tensors, f32 LN math inside the kernel).
    y_bf = jax.block_until_ready(state_encoder(x3.astype(jnp.bfloat16), params))
    assert y_bf.dtype == jnp.bfloat16 and y_bf.shape == y3_ref.shape
    assert jnp.allclose(y_bf.astype(jnp.float32), y3_ref, atol=2e-1), \
        float(jnp.max(jnp.abs(y_bf.astype(jnp.float32) - y3_ref)))

    print("KERNEL_OK")
</pallas_src>

<mosaic_0001>
module attributes {stable_mosaic.version = 11 : i64} {
  func.func @state_encoder_kernel(%arg0: i32, %arg1: memref<128x4xf32, #tpu.memory_space<vmem>>, %arg2: memref<32x4xf32, #tpu.memory_space<vmem>>, %arg3: memref<32x32xf32, #tpu.memory_space<vmem>>, %arg4: memref<32x32xf32, #tpu.memory_space<vmem>>, %arg5: memref<9x32xf32, #tpu.memory_space<vmem>>, %arg6: memref<128x32xf32, #tpu.memory_space<vmem>>) attributes {dimension_semantics = [#tpu.dimension_semantics<parallel>], iteration_bounds = array<i64: 1>, scalar_prefetch = 0 : i64, scratch_operands = 0 : i64, tpu.core_type = #tpu.core_type<tc>, window_params = [{transform_indices = @transform_0, window_bounds = array<i64: 128, 4>}, {pipeline_mode = #tpu.pipeline_mode<synchronous>, transform_indices = @transform_1, window_bounds = array<i64: 32, 4>}, {pipeline_mode = #tpu.pipeline_mode<synchronous>, transform_indices = @transform_2, window_bounds = array<i64: 32, 32>}, {pipeline_mode = #tpu.pipeline_mode<synchronous>, transform_indices = @transform_3, window_bounds = array<i64: 32, 32>}, {pipeline_mode = #tpu.pipeline_mode<synchronous>, transform_indices = @transform_4, window_bounds = array<i64: 9, 32>}, {transform_indices = @transform_5, window_bounds = array<i64: 128, 32>}]} {
    %c0 = arith.constant 0 : index
    %c0_0 = arith.constant 0 : index
    %0 = vector.load %arg1[%c0, %c0_0] : memref<128x4xf32, #tpu.memory_space<vmem>>, vector<128x4xf32>
    %c0_1 = arith.constant 0 : index
    %c0_2 = arith.constant 0 : index
    %1 = vector.load %arg2[%c0_1, %c0_2] : memref<32x4xf32, #tpu.memory_space<vmem>>, vector<32x4xf32>
    %cst = arith.constant dense<0.000000e+00> : vector<128x32xf32>
    %2 = tpu.matmul %0, %1, %cst {dimension_numbers = #tpu.dot_dimension_numbers<[1], [1], [0], [0], [0, 0, 1, 0], [], []>} : vector<128x4xf32>, vector<32x4xf32>, vector<128x32xf32> -> vector<128x32xf32>
    %c0_3 = arith.constant 0 : index
    %c0_4 = arith.constant 0 : index
    %3 = vector.load %arg5[%c0_3, %c0_4] : memref<9x32xf32, #tpu.memory_space<vmem>>, vector<1x32xf32>
    %4 = vector.broadcast %3 : vector<1x32xf32> to vector<128x32xf32>
    %5 = arith.addf %2, %4 : vector<128x32xf32>
    %cst_5 = arith.constant dense<0.000000e+00> : vector<128xf32>
    %6 = vector.multi_reduction <add>, %5, %cst_5 [1] : vector<128x32xf32> to vector<128xf32>
    %7 = vector.shape_cast %6 : vector<128xf32> to vector<128x1xf32>
    %cst_6 = arith.constant 3.200000e+01 : f32
    %8 = vector.broadcast %cst_6 : f32 to vector<128x1xf32>
    %9 = arith.divf %7, %8 : vector<128x1xf32>
    %10 = vector.broadcast %9 : vector<128x1xf32> to vector<128x32xf32>
    %11 = arith.subf %5, %10 : vector<128x32xf32>
    %12 = arith.mulf %11, %11 : vector<128x32xf32>
    %cst_7 = arith.constant dense<0.000000e+00> : vector<128xf32>
    %13 = vector.multi_reduction <add>, %12, %cst_7 [1] : vector<128x32xf32> to vector<128xf32>
    %14 = vector.shape_cast %13 : vector<128xf32> to vector<128x1xf32>
    %cst_8 = arith.constant 3.200000e+01 : f32
    %15 = vector.broadcast %cst_8 : f32 to vector<128x1xf32>
    %16 = arith.divf %14, %15 : vector<128x1xf32>
    %cst_9 = arith.constant 9.99999974E-6 : f32
    %17 = vector.broadcast %cst_9 : f32 to vector<128x1xf32>
    %18 = arith.addf %16, %17 : vector<128x1xf32>
    %19 = math.rsqrt %18 : vector<128x1xf32>
    %20 = vector.broadcast %19 : vector<128x1xf32> to vector<128x32xf32>
    %21 = arith.mulf %11, %20 : vector<128x32xf32>
    %c1 = arith.constant 1 : index
    %c0_10 = arith.constant 0 : index
    %22 = vector.load %arg5[%c1, %c0_10] : memref<9x32xf32, #tpu.memory_space<vmem>>, vector<1x32xf32>
    %23 = vector.broadcast %22 : vector<1x32xf32> to vector<128x32xf32>
    %24 = arith.mulf %21, %23 : vector<128x32xf32>
    %c2 = arith.constant 2 : index
    %c0_11 = arith.constant 0 : index
    %25 = vector.load %arg5[%c2, %c0_11] : memref<9x32xf32, #tpu.memory_space<vmem>>, vector<1x32xf32>
    %26 = vector.broadcast %25 : vector<1x32xf32> to vector<128x32xf32>
    %27 = arith.addf %24, %26 : vector<128x32xf32>
    %cst_12 = arith.constant 0.000000e+00 : f32
    %28 = vector.broadcast %cst_12 : f32 to vector<128x32xf32>
    %29 = arith.maximumf %27, %28 : vector<128x32xf32>
    %c0_13 = arith.constant 0 : index
    %c0_14 = arith.constant 0 : index
    %30 = vector.load %arg3[%c0_13, %c0_14] : memref<32x32xf32, #tpu.memory_space<vmem>>, vector<32x32xf32>
    %cst_15 = arith.constant dense<0.000000e+00> : vector<128x32xf32>
    %31 = tpu.matmul %29, %30, %cst_15 {dimension_numbers = #tpu.dot_dimension_numbers<[1], [1], [0], [0], [0, 0, 1, 0], [], []>} : vector<128x32xf32>, vector<32x32xf32>, vector<128x32xf32> -> vector<128x32xf32>
    %c3 = arith.constant 3 : index
    %c0_16 = arith.constant 0 : index
    %32 = vector.load %arg5[%c3, %c0_16] : memref<9x32xf32, #tpu.memory_space<vmem>>, vector<1x32xf32>
    %33 = vector.broadcast %32 : vector<1x32xf32> to vector<128x32xf32>
    %34 = arith.addf %31, %33 : vector<128x32xf32>
    %cst_17 = arith.constant dense<0.000000e+00> : vector<128xf32>
    %35 = vector.multi_reduction <add>, %34, %cst_17 [1] : vector<128x32xf32> to vector<128xf32>
    %36 = vector.shape_cast %35 : vector<128xf32> to vector<128x1xf32>
    %cst_18 = arith.constant 3.200000e+01 : f32
    %37 = vector.broadcast %cst_18 : f32 to vector<128x1xf32>
    %38 = arith.divf %36, %37 : vector<128x1xf32>
    %39 = vector.broadcast %38 : vector<128x1xf32> to vector<128x32xf32>
    %40 = arith.subf %34, %39 : vector<128x32xf32>
    %41 = arith.mulf %40, %40 : vector<128x32xf32>
    %cst_19 = arith.constant dense<0.000000e+00> : vector<128xf32>
    %42 = vector.multi_reduction <add>, %41, %cst_19 [1] : vector<128x32xf32> to vector<128xf32>
    %43 = vector.shape_cast %42 : vector<128xf32> to vector<128x1xf32>
    %cst_20 = arith.constant 3.200000e+01 : f32
    %44 = vector.broadcast %cst_20 : f32 to vector<128x1xf32>
    %45 = arith.divf %43, %44 : vector<128x1xf32>
    %cst_21 = arith.constant 9.99999974E-6 : f32
    %46 = vector.broadcast %cst_21 : f32 to vector<128x1xf32>
    %47 = arith.addf %45, %46 : vector<128x1xf32>
    %48 = math.rsqrt %47 : vector<128x1xf32>
    %49 = vector.broadcast %48 : vector<128x1xf32> to vector<128x32xf32>
    %50 = arith.mulf %40, %49 : vector<128x32xf32>
    %c4 = arith.constant 4 : index
    %c0_22 = arith.constant 0 : index
    %51 = vector.load %arg5[%c4, %c0_22] : memref<9x32xf32, #tpu.memory_space<vmem>>, vector<1x32xf32>
    %52 = vector.broadcast %51 : vector<1x32xf32> to vector<128x32xf32>
    %53 = arith.mulf %50, %52 : vector<128x32xf32>
    %c5 = arith.constant 5 : index
    %c0_23 = arith.constant 0 : index
    %54 = vector.load %arg5[%c5, %c0_23] : memref<9x32xf32, #tpu.memory_space<vmem>>, vector<1x32xf32>
    %55 = vector.broadcast %54 : vector<1x32xf32> to vector<128x32xf32>
    %56 = arith.addf %53, %55 : vector<128x32xf32>
    %cst_24 = arith.constant 0.000000e+00 : f32
    %57 = vector.broadcast %cst_24 : f32 to vector<128x32xf32>
    %58 = arith.maximumf %56, %57 : vector<128x32xf32>
    %c0_25 = arith.constant 0 : index
    %c0_26 = arith.constant 0 : index
    %59 = vector.load %arg4[%c0_25, %c0_26] : memref<32x32xf32, #tpu.memory_space<vmem>>, vector<32x32xf32>
    %cst_27 = arith.constant dense<0.000000e+00> : vector<128x32xf32>
    %60 = tpu.matmul %58, %59, %cst_27 {dimension_numbers = #tpu.dot_dimension_numbers<[1], [1], [0], [0], [0, 0, 1, 0], [], []>} : vector<128x32xf32>, vector<32x32xf32>, vector<128x32xf32> -> vector<128x32xf32>
    %c6 = arith.constant 6 : index
    %c0_28 = arith.constant 0 : index
    %61 = vector.load %arg5[%c6, %c0_28] : memref<9x32xf32, #tpu.memory_space<vmem>>, vector<1x32xf32>
    %62 = vector.broadcast %61 : vector<1x32xf32> to vector<128x32xf32>
    %63 = arith.addf %60, %62 : vector<128x32xf32>
    %cst_29 = arith.constant dense<0.000000e+00> : vector<128xf32>
    %64 = vector.multi_reduction <add>, %63, %cst_29 [1] : vector<128x32xf32> to vector<128xf32>
    %65 = vector.shape_cast %64 : vector<128xf32> to vector<128x1xf32>
    %cst_30 = arith.constant 3.200000e+01 : f32
    %66 = vector.broadcast %cst_30 : f32 to vector<128x1xf32>
    %67 = arith.divf %65, %66 : vector<128x1xf32>
    %68 = vector.broadcast %67 : vector<128x1xf32> to vector<128x32xf32>
    %69 = arith.subf %63, %68 : vector<128x32xf32>
    %70 = arith.mulf %69, %69 : vector<128x32xf32>
    %cst_31 = arith.constant dense<0.000000e+00> : vector<128xf32>
    %71 = vector.multi_reduction <add>, %70, %cst_31 [1] : vector<128x32xf32> to vector<128xf32>
    %72 = vector.shape_cast %71 : vector<128xf32> to vector<128x1xf32>
    %cst_32 = arith.constant 3.200000e+01 : f32
    %73 = vector.broadcast %cst_32 : f32 to vector<128x1xf32>
    %74 = arith.divf %72, %73 : vector<128x1xf32>
    %cst_33 = arith.constant 9.99999974E-6 : f32
    %75 = vector.broadcast %cst_33 : f32 to vector<128x1xf32>
    %76 = arith.addf %74, %75 : vector<128x1xf32>
    %77 = math.rsqrt %76 : vector<128x1xf32>
    %78 = vector.broadcast %77 : vector<128x1xf32> to vector<128x32xf32>
    %79 = arith.mulf %69, %78 : vector<128x32xf32>
    %c7 = arith.constant 7 : index
    %c0_34 = arith.constant 0 : index
    %80 = vector.load %arg5[%c7, %c0_34] : memref<9x32xf32, #tpu.memory_space<vmem>>, vector<1x32xf32>
    %81 = vector.broadcast %80 : vector<1x32xf32> to vector<128x32xf32>
    %82 = arith.mulf %79, %81 : vector<128x32xf32>
    %c8 = arith.constant 8 : index
    %c0_35 = arith.constant 0 : index
    %83 = vector.load %arg5[%c8, %c0_35] : memref<9x32xf32, #tpu.memory_space<vmem>>, vector<1x32xf32>
    %84 = vector.broadcast %83 : vector<1x32xf32> to vector<128x32xf32>
    %85 = arith.addf %82, %84 : vector<128x32xf32>
    %c0_36 = arith.constant 0 : index
    %c0_37 = arith.constant 0 : index
    %86 = vector.load %arg6[%c0_36, %c0_37] : memref<128x32xf32, #tpu.memory_space<vmem>>, vector<128x32xf32>
    tpu.vector_store %arg6[%c0_36, %c0_37], %85 {strides = array<i32>} : memref<128x32xf32, #tpu.memory_space<vmem>>, vector<128x32xf32>,
    return
  }
  func.func @transform_0(%arg0: i32) -> (i32, i32) {
    %c0_i32 = arith.constant 0 : i32
    %c0_i32_0 = arith.constant 0 : i32
    return %arg0, %c0_i32 : i32, i32
  }
  func.func @transform_1(%arg0: i32) -> (i32, i32) {
    %c0_i32 = arith.constant 0 : i32
    %c0_i32_0 = arith.constant 0 : i32
    %c0_i32_1 = arith.constant 0 : i32
    return %c0_i32, %c0_i32_0 : i32, i32
  }
  func.func @transform_2(%arg0: i32) -> (i32, i32) {
    %c0_i32 = arith.constant 0 : i32
    %c0_i32_0 = arith.constant 0 : i32
    %c0_i32_1 = arith.constant 0 : i32
    return %c0_i32, %c0_i32_0 : i32, i32
  }
  func.func @transform_3(%arg0: i32) -> (i32, i32) {
    %c0_i32 = arith.constant 0 : i32
    %c0_i32_0 = arith.constant 0 : i32
    %c0_i32_1 = arith.constant 0 : i32
    return %c0_i32, %c0_i32_0 : i32, i32
  }
  func.func @transform_4(%arg0: i32) -> (i32, i32) {
    %c0_i32 = arith.constant 0 : i32
    %c0_i32_0 = arith.constant 0 : i32
    %c0_i32_1 = arith.constant 0 : i32
    return %c0_i32, %c0_i32_0 : i32, i32
  }
  func.func @transform_5(%arg0: i32) -> (i32, i32) {
    %c0_i32 = arith.constant 0 : i32
    %c0_i32_0 = arith.constant 0 : i32
    return %arg0, %c0_i32 : i32, i32
  }
}

</mosaic_0001>

<llo_original>
// kernel: state_encoder.1
$region0: #{state_encoder.1}
  #allocation0 [shape = 'u32[]', space=smem, size = 0x4, offset = 0x4, fixed_abs, tag = 'smem constant byte address 0x4 - core index']
  #allocation1 [shape = 'u32[72,128]{1,0:T(1,128)}', space=vmem, size = 0x9000, scoped, tag = 'internal scratch']
  %s0 = inlined_call_operand.vmem [shape: f32[16,4], index: 0, kind: input, shape index: {}]
  %s1 = inlined_call_operand.vmem [shape: f32[32,4], index: 1, kind: input, shape index: {}]
  %s2 = inlined_call_operand.vmem [shape: f32[32,32], index: 2, kind: input, shape index: {}]
  %s3 = inlined_call_operand.vmem [shape: f32[32,32], index: 3, kind: input, shape index: {}]
  %s4 = inlined_call_operand.vmem [shape: f32[9,32], index: 4, kind: input, shape index: {}]
  %s5 = inlined_call_operand.hbm [shape: f32[16,32], index: 5, kind: output, shape index: {}]
  %s6 = sld [smem:[#allocation0]]
  $region30: #{state_encoder.1} parent=0
    _
  %s8 = ssub.s32 1, %s6
  %s9 = scalar_select 0, %s8, %s6
  $region1: #{state_encoder.1} parent=0
    #allocation2 [shape = 'u8[65536]{0}', space=vmem, size = 0x10000, scoped, tag = 'output window, operand 0, single buffered']
    #allocation3 [shape = 's32[1]{0}', space=sflag, size = 0x4, scoped, tag = 'scoped memory for state_encoder.1']
    %10 = vsyncpa [#allocation3], 0
    // Predicated region
    $region2: #{state_encoder.1} parent=1 // pred_check
      _
    $region3: #{state_encoder.1} parent=1 // pred_check_branch
      %12 = sbr.rel (0) target = $region5
    $region4: #{state_encoder.1} parent=1 // pred_region
      _
    $region5: #{state_encoder.1} parent=1 // pred_fallthru
      _
    // Predicated region
    $region6: #{state_encoder.1} parent=1 // pred_check
      _
    $region7: #{state_encoder.1} parent=1 // pred_check_branch
      %14 = sbr.rel (0) target = $region9
    $region8: #{state_encoder.1} parent=1 // pred_region
      _
    $region9: #{state_encoder.1} parent=1 // pred_fallthru
      _
    // Predicated region
    $region10: #{state_encoder.1} parent=1 // pred_check
      _
    $region11: #{state_encoder.1} parent=1 // pred_check_branch
      %16 = sbr.rel (0) target = $region13
    $region12: #{state_encoder.1} parent=1 // pred_region
      _
    $region13: #{state_encoder.1} parent=1 // pred_fallthru
      _
    // Predicated region
    $region14: #{state_encoder.1} parent=1 // pred_check
      _
    $region15: #{state_encoder.1} parent=1 // pred_check_branch
      %18 = sbr.rel (0) target = $region17
    $region16: #{state_encoder.1} parent=1 // pred_region
      _
    $region17: #{state_encoder.1} parent=1 // pred_fallthru
      _
    // Predicated region
    $region18: #{state_encoder.1} parent=1 // pred_check
      _
    $region19: #{state_encoder.1} parent=1 // pred_check_branch
      %20 = sbr.rel (0) target = $region21
    $region20: #{state_encoder.1} parent=1 // pred_region
      _
    $region21: #{state_encoder.1} parent=1 // pred_fallthru
      _
    %v21 = vld [vmem:[%s0] sm:$0xff]
    %v22 = vld [vmem:[%s0 + $0x8] sm:$0xff]
    %v23 = vld [vmem:[%s0 + $0x10] sm:$0xff]
    %v24 = vld [vmem:[%s0 + $0x18] sm:$0xff]
    %v25 = vld [vmem:[%s0 + $0x20] sm:$0xff]
    %v26 = vld [vmem:[%s0 + $0x28] sm:$0xff]
    %v27 = vld [vmem:[%s0 + $0x30] sm:$0xff]
    %v28 = vld [vmem:[%s0 + $0x38] sm:$0xff]
    %v29 = vld [vmem:[%s0 + $0x40] sm:$0xff]
    %v30 = vld [vmem:[%s0 + $0x48] sm:$0xff]
    %v31 = vld [vmem:[%s0 + $0x50] sm:$0xff]
    %v32 = vld [vmem:[%s0 + $0x58] sm:$0xff]
    %v33 = vld [vmem:[%s0 + $0x60] sm:$0xff]
    %v34 = vld [vmem:[%s0 + $0x68] sm:$0xff]
    %v35 = vld [vmem:[%s0 + $0x70] sm:$0xff]
    %v36 = vld [vmem:[%s0 + $0x78] sm:$0xff]
    %v37 = vld [vmem:[%s1] sm:$0xff]
    %v38 = vld [vmem:[%s1 + $0x8] sm:$0xff]
    %v39 = vld [vmem:[%s1 + $0x10] sm:$0xff]
    %v40 = vld [vmem:[%s1 + $0x18] sm:$0xff]
    %v41 = vld [vmem:[%s4] sm:$0x1]
    %v42 = vperm.slane %v41, 0
    %vm43 = vcmask 31744
    %v45 = vsel %vm43, %v21, 0
    %v48 = vsel %vm43, %v22, 0
    %v51 = vsel %vm43, %v23, 0
    %v54 = vsel %vm43, %v24, 0
    %v57 = vsel %vm43, %v25, 0
    %v60 = vsel %vm43, %v26, 0
    %v63 = vsel %vm43, %v27, 0
    %v66 = vsel %vm43, %v28, 0
    %v69 = vsel %vm43, %v29, 0
    %v72 = vsel %vm43, %v30, 0
    %v75 = vsel %vm43, %v31, 0
    %v78 = vsel %vm43, %v32, 0
    %v81 = vsel %vm43, %v33, 0
    %v84 = vsel %vm43, %v34, 0
    %v87 = vsel %vm43, %v35, 0
    %v90 = vsel %vm43, %v36, 0
    %v93 = vsel %vm43, %v37, 0
    %v96 = vsel %vm43, %v38, 0
    %v99 = vsel %vm43, %v39, 0
    %v102 = vsel %vm43, %v40, 0
    %104 = vmatpush.xpose.msra.mxu0 0.0
    %105 = vmatpush.xpose.msra.mxu0 0.0
    %106 = vmatpush.xpose.msra.mxu0 0.0
    %107 = vmatpush.xpose.msra.mxu0 0.0
    %108 = vmatpush.xpose.msra.mxu0 0.0
    %109 = vmatpush.xpose.msra.mxu0 0.0
    %110 = vmatpush.xpose.msra.mxu0 0.0
    %111 = vmatpush.xpose.msra.mxu0 0.0
    %112 = vmatpush.xpose.msra.mxu0 0.0
    %113 = vmatpush.xpose.msra.mxu0 0.0
    %114 = vmatpush.xpose.msra.mxu0 0.0
    %115 = vmatpush.xpose.msra.mxu0 0.0
    %116 = vmatpush.xpose.msra.mxu0 %v102
    %117 = vmatpush.xpose.msra.mxu0 %v99
    %118 = vmatpush.xpose.msra.mxu0 %v96
    %119 = vmatpush.xpose.msra.mxu0 %v93
    %120 = vmatmul.f32.gmra.mxu0 %v45
    %v121 = vpop.f32.mrf.mxu0
    %v122 = vadd.f32 %v42, %v121
    %123 = vmatmul.f32.gmra.mxu0 %v48
    %v124 = vpop.f32.mrf.mxu0
    %v125 = vadd.f32 %v42, %v124
    %126 = vmatmul.f32.gmra.mxu0 %v51
    %v127 = vpop.f32.mrf.mxu0
    %v128 = vadd.f32 %v42, %v127
    %129 = vmatmul.f32.gmra.mxu0 %v54
    %v130 = vpop.f32.mrf.mxu0
    %v131 = vadd.f32 %v42, %v130
    %132 = vmatmul.f32.gmra.mxu0 %v57
    %v133 = vpop.f32.mrf.mxu0
    %v134 = vadd.f32 %v42, %v133
    %135 = vmatmul.f32.gmra.mxu0 %v60
    %v136 = vpop.f32.mrf.mxu0
    %v137 = vadd.f32 %v42, %v136
    %138 = vmatmul.f32.gmra.mxu0 %v63
    %v139 = vpop.f32.mrf.mxu0
    %v140 = vadd.f32 %v42, %v139
    %141 = vmatmul.f32.gmra.mxu0 %v66
    %v142 = vpop.f32.mrf.mxu0
    %v143 = vadd.f32 %v42, %v142
    %144 = vmatmul.f32.gmra.mxu0 %v69
    %v145 = vpop.f32.mrf.mxu0
    %v146 = vadd.f32 %v42, %v145
    %147 = vmatmul.f32.gmra.mxu0 %v72
    %v148 = vpop.f32.mrf.mxu0
    %v149 = vadd.f32 %v42, %v148
    %150 = vmatmul.f32.gmra.mxu0 %v75
    %v151 = vpop.f32.mrf.mxu0
    %v152 = vadd.f32 %v42, %v151
    %153 = vmatmul.f32.gmra.mxu0 %v78
    %v154 = vpop.f32.mrf.mxu0
    %v155 = vadd.f32 %v42, %v154
    %156 = vmatmul.f32.gmra.mxu0 %v81
    %v157 = vpop.f32.mrf.mxu0
    %v158 = vadd.f32 %v42, %v157
    %159 = vmatmul.f32.gmra.mxu0 %v84
    %v160 = vpop.f32.mrf.mxu0
    %v161 = vadd.f32 %v42, %v160
    %162 = vmatmul.f32.gmra.mxu0 %v87
    %v163 = vpop.f32.mrf.mxu0
    %v164 = vadd.f32 %v42, %v163
    %165 = vmatmul.f32.gmra.mxu0 %v90
    %v166 = vpop.f32.mrf.mxu0
    %v167 = vadd.f32 %v42, %v166
    %168 = vdwg.mxu0
    %vm169 = vcmask 261120
    %v170 = vsel %vm169, %v122, 0.0
    %171 = vadd.xlane.f32.xlu0 %v170
    %v172 = vpop.xlane.xlu0 %171
    %v173 = vsel %vm169, %v125, 0.0
    %174 = vadd.xlane.f32.xlu0 %v173
    %v175 = vpop.xlane.xlu0 %174
    %v176 = vsel %vm169, %v128, 0.0
    %177 = vadd.xlane.f32.xlu0 %v176
    %v178 = vpop.xlane.xlu0 %177
    %v179 = vsel %vm169, %v131, 0.0
    %180 = vadd.xlane.f32.xlu0 %v179
    %v181 = vpop.xlane.xlu0 %180
    %v182 = vsel %vm169, %v134, 0.0
    %183 = vadd.xlane.f32.xlu0 %v182
    %v184 = vpop.xlane.xlu0 %183
    %v185 = vsel %vm169, %v137, 0.0
    %186 = vadd.xlane.f32.xlu0 %v185
    %v187 = vpop.xlane.xlu0 %186
    %v188 = vsel %vm169, %v140, 0.0
    %189 = vadd.xlane.f32.xlu0 %v188
    %v190 = vpop.xlane.xlu0 %189
    %v191 = vsel %vm169, %v143, 0.0
    %192 = vadd.xlane.f32.xlu0 %v191
    %v193 = vpop.xlane.xlu0 %192
    %v194 = vsel %vm169, %v146, 0.0
    %195 = vadd.xlane.f32.xlu0 %v194
    %v196 = vpop.xlane.xlu0 %195
    %v197 = vsel %vm169, %v149, 0.0
    %198 = vadd.xlane.f32.xlu0 %v197
    %v199 = vpop.xlane.xlu0 %198
    %v200 = vsel %vm169, %v152, 0.0
    %201 = vadd.xlane.f32.xlu0 %v200
    %v202 = vpop.xlane.xlu0 %201
    %v203 = vsel %vm169, %v155, 0.0
    %204 = vadd.xlane.f32.xlu0 %v203
    %v205 = vpop.xlane.xlu0 %204
    %v206 = vsel %vm169, %v158, 0.0
    %207 = vadd.xlane.f32.xlu0 %v206
    %v208 = vpop.xlane.xlu0 %207
    %v209 = vsel %vm169, %v161, 0.0
    %210 = vadd.xlane.f32.xlu0 %v209
    %v211 = vpop.xlane.xlu0 %210
    %v212 = vsel %vm169, %v164, 0.0
    %213 = vadd.xlane.f32.xlu0 %v212
    %v214 = vpop.xlane.xlu0 %213
    %v215 = vsel %vm169, %v167, 0.0
    %216 = vadd.xlane.f32.xlu0 %v215
    %v217 = vpop.xlane.xlu0 %216
    %v218 = vrcp.pop 32.0
    %v219 = vmul.f32 32.0, %v218
    %v220 = vsub.f32 1.0, %v219
    %v221 = vmul.f32 %v218, %v220
    %v222 = vadd.f32 %v218, %v221
    %vm223 = vweird.f32 %v218
    %v224 = vsel %vm223, %v218, %v222
    %v225 = vmul.f32 %v172, %v224
    %v226 = vmul.f32 %v175, %v224
    %v227 = vmul.f32 %v178, %v224
    %v228 = vmul.f32 %v181, %v224
    %v229 = vmul.f32 %v184, %v224
    %v230 = vmul.f32 %v187, %v224
    %v231 = vmul.f32 %v190, %v224
    %v232 = vmul.f32 %v193, %v224
    %v233 = vmul.f32 %v196, %v224
    %v234 = vmul.f32 %v199, %v224
    %v235 = vmul.f32 %v202, %v224
    %v236 = vmul.f32 %v205, %v224
    %v237 = vmul.f32 %v208, %v224
    %v238 = vmul.f32 %v211, %v224
    %v239 = vmul.f32 %v214, %v224
    %v240 = vmul.f32 %v217, %v224
    %v241 = vsub.f32 %v122, %v225
    %v242 = vsub.f32 %v125, %v226
    %v243 = vsub.f32 %v128, %v227
    %v244 = vsub.f32 %v131, %v228
    %v245 = vsub.f32 %v134, %v229
    %v246 = vsub.f32 %v137, %v230
    %v247 = vsub.f32 %v140, %v231
    %v248 = vsub.f32 %v143, %v232
    %v249 = vsub.f32 %v146, %v233
    %v250 = vsub.f32 %v149, %v234
    %v251 = vsub.f32 %v152, %v235
    %v252 = vsub.f32 %v155, %v236
    %v253 = vsub.f32 %v158, %v237
    %v254 = vsub.f32 %v161, %v238
    %v255 = vsub.f32 %v164, %v239
    %v256 = vsub.f32 %v167, %v240
    %v257 = vmul.f32 %v241, %v241
    %v258 = vmul.f32 %v242, %v242
    %v259 = vmul.f32 %v243, %v243
    %v260 = vmul.f32 %v244, %v244
    %v261 = vmul.f32 %v245, %v245
    %v262 = vmul.f32 %v246, %v246
    %v263 = vmul.f32 %v247, %v247
    %v264 = vmul.f32 %v248, %v248
    %v265 = vmul.f32 %v249, %v249
    %v266 = vmul.f32 %v250, %v250
    %v267 = vmul.f32 %v251, %v251
    %v268 = vmul.f32 %v252, %v252
    %v269 = vmul.f32 %v253, %v253
    %v270 = vmul.f32 %v254, %v254
    %v271 = vmul.f32 %v255, %v255
    %v272 = vmul.f32 %v256, %v256
    %v273 = vsel %vm169, %v257, 0.0
    %274 = vadd.xlane.f32.xlu0 %v273
    %v275 = vpop.xlane.xlu0 %274
    %v276 = vsel %vm169, %v258, 0.0
    %277 = vadd.xlane.f32.xlu0 %v276
    %v278 = vpop.xlane.xlu0 %277
    %v279 = vsel %vm169, %v259, 0.0
    %280 = vadd.xlane.f32.xlu0 %v279
    %v281 = vpop.xlane.xlu0 %280
    %v282 = vsel %vm169, %v260, 0.0
    %283 = vadd.xlane.f32.xlu0 %v282
    %v284 = vpop.xlane.xlu0 %283
    %v285 = vsel %vm169, %v261, 0.0
    %286 = vadd.xlane.f32.xlu0 %v285
    %v287 = vpop.xlane.xlu0 %286
    %v288 = vsel %vm169, %v262, 0.0
    %289 = vadd.xlane.f32.xlu0 %v288
    %v290 = vpop.xlane.xlu0 %289
    %v291 = vsel %vm169, %v263, 0.0
    %292 = vadd.xlane.f32.xlu0 %v291
    %v293 = vpop.xlane.xlu0 %292
    %v294 = vsel %vm169, %v264, 0.0
    %295 = vadd.xlane.f32.xlu0 %v294
    %v296 = vpop.xlane.xlu0 %295
    %v297 = vsel %vm169, %v265, 0.0
    %298 = vadd.xlane.f32.xlu0 %v297
    %v299 = vpop.xlane.xlu0 %298
    %v300 = vsel %vm169, %v266, 0.0
    %301 = vadd.xlane.f32.xlu0 %v300
    %v302 = vpop.xlane.xlu0 %301
    %v303 = vsel %vm169, %v267, 0.0
    %304 = vadd.xlane.f32.xlu0 %v303
    %v305 = vpop.xlane.xlu0 %304
    %v306 = vsel %vm169, %v268, 0.0
    %307 = vadd.xlane.f32.xlu0 %v306
    %v308 = vpop.xlane.xlu0 %307
    %v309 = vsel %vm169, %v269, 0.0
    %310 = vadd.xlane.f32.xlu0 %v309
    %v311 = vpop.xlane.xlu0 %310
    %v312 = vsel %vm169, %v270, 0.0
    %313 = vadd.xlane.f32.xlu0 %v312
    %v314 = vpop.xlane.xlu0 %313
    %v315 = vsel %vm169, %v271, 0.0
    %316 = vadd.xlane.f32.xlu0 %v315
    %v317 = vpop.xlane.xlu0 %316
    %v318 = vsel %vm169, %v272, 0.0
    %319 = vadd.xlane.f32.xlu0 %v318
    %v320 = vpop.xlane.xlu0 %319
    %v321 = vmul.f32 %v275, %v224
    %v322 = vmul.f32 %v278, %v224
    %v323 = vmul.f32 %v281, %v224
    %v324 = vmul.f32 %v284, %v224
    %v325 = vmul.f32 %v287, %v224
    %v326 = vmul.f32 %v290, %v224
    %v327 = vmul.f32 %v293, %v224
    %v328 = vmul.f32 %v296, %v224
    %v329 = vmul.f32 %v299, %v224
    %v330 = vmul.f32 %v302, %v224
    %v331 = vmul.f32 %v305, %v224
    %v332 = vmul.f32 %v308, %v224
    %v333 = vmul.f32 %v311, %v224
    %v334 = vmul.f32 %v314, %v224
    %v335 = vmul.f32 %v317, %v224
    %v336 = vmul.f32 %v320, %v224
    %v337 = vadd.f32 %v321, 1e-05
    %v338 = vadd.f32 %v322, 1e-05
    %v339 = vadd.f32 %v323, 1e-05
    %v340 = vadd.f32 %v324, 1e-05
    %v341 = vadd.f32 %v325, 1e-05
    %v342 = vadd.f32 %v326, 1e-05
    %v343 = vadd.f32 %v327, 1e-05
    %v344 = vadd.f32 %v328, 1e-05
    %v345 = vadd.f32 %v329, 1e-05
    %v346 = vadd.f32 %v330, 1e-05
    %v347 = vadd.f32 %v331, 1e-05
    %v348 = vadd.f32 %v332, 1e-05
    %v349 = vadd.f32 %v333, 1e-05
    %v350 = vadd.f32 %v334, 1e-05
    %v351 = vadd.f32 %v335, 1e-05
    %v352 = vadd.f32 %v336, 1e-05
    %v353 = vrsqrt.pop %v337
    %v354 = vmul.f32 %v353, %v337
    %v355 = vmul.f32 %v354, %v353
    %v356 = vmul.f32 0.5, %v355
    %v357 = vsub.f32 1.5, %v356
    %v358 = vmul.f32 %v353, %v357
    %vm359 = vweird.f32 %v337
    %vm360 = vweird.f32 %v353
    %vm361 = vmor %vm359, %vm360
    %v362 = vsel %vm361, %v353, %v358
    %v363 = vrsqrt.pop %v338
    %v364 = vmul.f32 %v363, %v338
    %v365 = vmul.f32 %v364, %v363
    %v366 = vmul.f32 0.5, %v365
    %v367 = vsub.f32 1.5, %v366
    %v368 = vmul.f32 %v363, %v367
    %vm369 = vweird.f32 %v338
    %vm370 = vweird.f32 %v363
    %vm371 = vmor %vm369, %vm370
    %v372 = vsel %vm371, %v363, %v368
    %v373 = vrsqrt.pop %v339
    %v374 = vmul.f32 %v373, %v339
    %v375 = vmul.f32 %v374, %v373
    %v376 = vmul.f32 0.5, %v375
    %v377 = vsub.f32 1.5, %v376
    %v378 = vmul.f32 %v373, %v377
    %vm379 = vweird.f32 %v339
    %vm380 = vweird.f32 %v373
    %vm381 = vmor %vm379, %vm380
    %v382 = vsel %vm381, %v373, %v378
    %v383 = vrsqrt.pop %v340
    %v384 = vmul.f32 %v383, %v340
    %v385 = vmul.f32 %v384, %v383
    %v386 = vmul.f32 0.5, %v385
    %v387 = vsub.f32 1.5, %v386
    %v388 = vmul.f32 %v383, %v387
    %vm389 = vweird.f32 %v340
    %vm390 = vweird.f32 %v383
    %vm391 = vmor %vm389, %vm390
    %v392 = vsel %vm391, %v383, %v388
    %v393 = vrsqrt.pop %v341
    %v394 = vmul.f32 %v393, %v341
    %v395 = vmul.f32 %v394, %v393
    %v396 = vmul.f32 0.5, %v395
    %v397 = vsub.f32 1.5, %v396
    %v398 = vmul.f32 %v393, %v397
    %vm399 = vweird.f32 %v341
    %vm400 = vweird.f32 %v393
    %vm401 = vmor %vm399, %vm400
    %v402 = vsel %vm401, %v393, %v398
    %v403 = vrsqrt.pop %v342
    %v404 = vmul.f32 %v403, %v342
    %v405 = vmul.f32 %v404, %v403
    %v406 = vmul.f32 0.5, %v405
    %v407 = vsub.f32 1.5, %v406
    %v408 = vmul.f32 %v403, %v407
    %vm409 = vweird.f32 %v342
    %vm410 = vweird.f32 %v403
    %vm411 = vmor %vm409, %vm410
    %v412 = vsel %vm411, %v403, %v408
    %v413 = vrsqrt.pop %v343
    %v414 = vmul.f32 %v413, %v343
    %v415 = vmul.f32 %v414, %v413
    %v416 = vmul.f32 0.5, %v415
    %v417 = vsub.f32 1.5, %v416
    %v418 = vmul.f32 %v413, %v417
    %vm419 = vweird.f32 %v343
    %vm420 = vweird.f32 %v413
    %vm421 = vmor %vm419, %vm420
    %v422 = vsel %vm421, %v413, %v418
    %v423 = vrsqrt.pop %v344
    %v424 = vmul.f32 %v423, %v344
    %v425 = vmul.f32 %v424, %v423
    %v426 = vmul.f32 0.5, %v425
    %v427 = vsub.f32 1.5, %v426
    %v428 = vmul.f32 %v423, %v427
    %vm429 = vweird.f32 %v344
    %vm430 = vweird.f32 %v423
    %vm431 = vmor %vm429, %vm430
    %v432 = vsel %vm431, %v423, %v428
    %v433 = vrsqrt.pop %v345
    %v434 = vmul.f32 %v433, %v345
    %v435 = vmul.f32 %v434, %v433
    %v436 = vmul.f32 0.5, %v435
    %v437 = vsub.f32 1.5, %v436
    %v438 = vmul.f32 %v433, %v437
    %vm439 = vweird.f32 %v345
    %vm440 = vweird.f32 %v433
    %vm441 = vmor %vm439, %vm440
    %v442 = vsel %vm441, %v433, %v438
    %v443 = vrsqrt.pop %v346
    %v444 = vmul.f32 %v443, %v346
    %v445 = vmul.f32 %v444, %v443
    %v446 = vmul.f32 0.5, %v445
    %v447 = vsub.f32 1.5, %v446
    %v448 = vmul.f32 %v443, %v447
    %vm449 = vweird.f32 %v346
    %vm450 = vweird.f32 %v443
    %vm451 = vmor %vm449, %vm450
    %v452 = vsel %vm451, %v443, %v448
    %v453 = vrsqrt.pop %v347
    %v454 = vmul.f32 %v453, %v347
    %v455 = vmul.f32 %v454, %v453
    %v456 = vmul.f32 0.5, %v455
    %v457 = vsub.f32 1.5, %v456
    %v458 = vmul.f32 %v453, %v457
    %vm459 = vweird.f32 %v347
    %vm460 = vweird.f32 %v453
    %vm461 = vmor %vm459, %vm460
    %v462 = vsel %vm461, %v453, %v458
    %v463 = vrsqrt.pop %v348
    %v464 = vmul.f32 %v463, %v348
    %v465 = vmul.f32 %v464, %v463
    %v466 = vmul.f32 0.5, %v465
    %v467 = vsub.f32 1.5, %v466
    %v468 = vmul.f32 %v463, %v467
    %vm469 = vweird.f32 %v348
    %vm470 = vweird.f32 %v463
    %vm471 = vmor %vm469, %vm470
    %v472 = vsel %vm471, %v463, %v468
    %v473 = vrsqrt.pop %v349
    %v474 = vmul.f32 %v473, %v349
    %v475 = vmul.f32 %v474, %v473
    %v476 = vmul.f32 0.5, %v475
    %v477 = vsub.f32 1.5, %v476
    %v478 = vmul.f32 %v473, %v477
    %vm479 = vweird.f32 %v349
    %vm480 = vweird.f32 %v473
    %vm481 = vmor %vm479, %vm480
    %v482 = vsel %vm481, %v473, %v478
    %v483 = vrsqrt.pop %v350
    %v484 = vmul.f32 %v483, %v350
    %v485 = vmul.f32 %v484, %v483
    %v486 = vmul.f32 0.5, %v485
    %v487 = vsub.f32 1.5, %v486
    %v488 = vmul.f32 %v483, %v487
    %vm489 = vweird.f32 %v350
    %vm490 = vweird.f32 %v483
    %vm491 = vmor %vm489, %vm490
    %v492 = vsel %vm491, %v483, %v488
    %v493 = vrsqrt.pop %v351
    %v494 = vmul.f32 %v493, %v351
    %v495 = vmul.f32 %v494, %v493
    %v496 = vmul.f32 0.5, %v495
    %v497 = vsub.f32 1.5, %v496
    %v498 = vmul.f32 %v493, %v497
    %vm499 = vweird.f32 %v351
    %vm500 = vweird.f32 %v493
    %vm501 = vmor %vm499, %vm500
    %v502 = vsel %vm501, %v493, %v498
    %v503 = vrsqrt.pop %v352
    %v504 = vmul.f32 %v503, %v352
    %v505 = vmul.f32 %v504, %v503
    %v506 = vmul.f32 0.5, %v505
    %v507 = vsub.f32 1.5, %v506
    %v508 = vmul.f32 %v503, %v507
    %vm509 = vweird.f32 %v352
    %vm510 = vweird.f32 %v503
    %vm511 = vmor %vm509, %vm510
    %v512 = vsel %vm511, %v503, %v508
    %v513 = vmul.f32 %v241, %v362
    %v514 = vmul.f32 %v242, %v372
    %v515 = vmul.f32 %v243, %v382
    %v516 = vmul.f32 %v244, %v392
    %v517 = vmul.f32 %v245, %v402
    %v518 = vmul.f32 %v246, %v412
    %v519 = vmul.f32 %v247, %v422
    %v520 = vmul.f32 %v248, %v432
    %v521 = vmul.f32 %v249, %v442
    %v522 = vmul.f32 %v250, %v452
    %v523 = vmul.f32 %v251, %v462
    %v524 = vmul.f32 %v252, %v472
    %v525 = vmul.f32 %v253, %v482
    %v526 = vmul.f32 %v254, %v492
    %v527 = vmul.f32 %v255, %v502
    %v528 = vmul.f32 %v256, %v512
    %v529 = vld [vmem:[%s4 + $0x1] sm:$0x1]
    %v530 = vperm.slane %v529, 0
    %v531 = vmul.f32 %v513, %v530
    %v532 = vmul.f32 %v514, %v530
    %v533 = vmul.f32 %v515, %v530
    %v534 = vmul.f32 %v516, %v530
    %v535 = vmul.f32 %v517, %v530
    %v536 = vmul.f32 %v518, %v530
    %v537 = vmul.f32 %v519, %v530
    %v538 = vmul.f32 %v520, %v530
    %v539 = vmul.f32 %v521, %v530
    %v540 = vmul.f32 %v522, %v530
    %v541 = vmul.f32 %v523, %v530
    %v542 = vmul.f32 %v524, %v530
    %v543 = vmul.f32 %v525, %v530
    %v544 = vmul.f32 %v526, %v530
    %v545 = vmul.f32 %v527, %v530
    %v546 = vmul.f32 %v528, %v530
    %v547 = vld [vmem:[%s4 + $0x2] sm:$0x1]
    %v548 = vperm.slane %v547, 0
    %v549 = vadd.f32 %v531, %v548
    %v550 = vadd.f32 %v532, %v548
    %v551 = vadd.f32 %v533, %v548
    %v552 = vadd.f32 %v534, %v548
    %v553 = vadd.f32 %v535, %v548
    %v554 = vadd.f32 %v536, %v548
    %v555 = vadd.f32 %v537, %v548
    %v556 = vadd.f32 %v538, %v548
    %v557 = vadd.f32 %v539, %v548
    %v558 = vadd.f32 %v540, %v548
    %v559 = vadd.f32 %v541, %v548
    %v560 = vadd.f32 %v542, %v548
    %v561 = vadd.f32 %v543, %v548
    %v562 = vadd.f32 %v544, %v548
    %v563 = vadd.f32 %v545, %v548
    %v564 = vadd.f32 %v546, %v548
    %v565 = vmax.f32 %v549, 0.0
    %v566 = vmax.f32 %v550, 0.0
    %v567 = vmax.f32 %v551, 0.0
    %v568 = vmax.f32 %v552, 0.0
    %v569 = vmax.f32 %v553, 0.0
    %v570 = vmax.f32 %v554, 0.0
    %v571 = vmax.f32 %v555, 0.0
    %v572 = vmax.f32 %v556, 0.0
    %v573 = vmax.f32 %v557, 0.0
    %v574 = vmax.f32 %v558, 0.0
    %v575 = vmax.f32 %v559, 0.0
    %v576 = vmax.f32 %v560, 0.0
    %v577 = vmax.f32 %v561, 0.0
    %v578 = vmax.f32 %v562, 0.0
    %v579 = vmax.f32 %v563, 0.0
    %v580 = vmax.f32 %v564, 0.0
    %v581 = vld [vmem:[%s2] sm:$0xff]
    %v582 = vld [vmem:[%s2 + $0x8] sm:$0xff]
    %v583 = vld [vmem:[%s2 + $0x10] sm:$0xff]
    %v584 = vld [vmem:[%s2 + $0x18] sm:$0xff]
    %v585 = vld [vmem:[%s4 + $0x3] sm:$0x1]
    %v586 = vperm.slane %v585, 0
    %v588 = vsel %vm169, %v565, 0
    %v591 = vsel %vm169, %v566, 0
    %v594 = vsel %vm169, %v567, 0
    %v597 = vsel %vm169, %v568, 0
    %v600 = vsel %vm169, %v569, 0
    %v603 = vsel %vm169, %v570, 0
    %v606 = vsel %vm169, %v571, 0
    %v609 = vsel %vm169, %v572, 0
    %v612 = vsel %vm169, %v573, 0
    %v615 = vsel %vm169, %v574, 0
    %v618 = vsel %vm169, %v575, 0
    %v621 = vsel %vm169, %v576, 0
    %v624 = vsel %vm169, %v577, 0
    %v627 = vsel %vm169, %v578, 0
    %v630 = vsel %vm169, %v579, 0
    %v633 = vsel %vm169, %v580, 0
    %v636 = vsel %vm169, %v581, 0
    %v639 = vsel %vm169, %v582, 0
    %v642 = vsel %vm169, %v583, 0
    %v645 = vsel %vm169, %v584, 0
    %647 = vmatpush.xpose.msra.mxu0 0.0
    %648 = vmatpush.xpose.msra.mxu0 0.0
    %649 = vmatpush.xpose.msra.mxu0 0.0
    %650 = vmatpush.xpose.msra.mxu0 0.0
    %651 = vmatpush.xpose.msra.mxu0 0.0
    %652 = vmatpush.xpose.msra.mxu0 0.0
    %653 = vmatpush.xpose.msra.mxu0 0.0
    %654 = vmatpush.xpose.msra.mxu0 0.0
    %655 = vmatpush.xpose.msra.mxu0 0.0
    %656 = vmatpush.xpose.msra.mxu0 0.0
    %657 = vmatpush.xpose.msra.mxu0 0.0
    %658 = vmatpush.xpose.msra.mxu0 0.0
    %659 = vmatpush.xpose.msra.mxu0 %v645
    %660 = vmatpush.xpose.msra.mxu0 %v642
    %661 = vmatpush.xpose.msra.mxu0 %v639
    %662 = vmatpush.xpose.msra.mxu0 %v636
    %663 = vmatmul.f32.gmra.mxu0 %v588
    %v664 = vpop.f32.mrf.mxu0
    %v665 = vadd.f32 %v586, %v664
    %666 = vmatmul.f32.gmra.mxu0 %v591
    %v667 = vpop.f32.mrf.mxu0
    %v668 = vadd.f32 %v586, %v667
    %669 = vmatmul.f32.gmra.mxu0 %v594
    %v670 = vpop.f32.mrf.mxu0
    %v671 = vadd.f32 %v586, %v670
    %672 = vmatmul.f32.gmra.mxu0 %v597
    %v673 = vpop.f32.mrf.mxu0
    %v674 = vadd.f32 %v586, %v673
    %675 = vmatmul.f32.gmra.mxu0 %v600
    %v676 = vpop.f32.mrf.mxu0
    %v677 = vadd.f32 %v586, %v676
    %678 = vmatmul.f32.gmra.mxu0 %v603
    %v679 = vpop.f32.mrf.mxu0
    %v680 = vadd.f32 %v586, %v679
    %681 = vmatmul.f32.gmra.mxu0 %v606
    %v682 = vpop.f32.mrf.mxu0
    %v683 = vadd.f32 %v586, %v682
    %684 = vmatmul.f32.gmra.mxu0 %v609
    %v685 = vpop.f32.mrf.mxu0
    %v686 = vadd.f32 %v586, %v685
    %687 = vmatmul.f32.gmra.mxu0 %v612
    %v688 = vpop.f32.mrf.mxu0
    %v689 = vadd.f32 %v586, %v688
    %690 = vmatmul.f32.gmra.mxu0 %v615
    %v691 = vpop.f32.mrf.mxu0
    %v692 = vadd.f32 %v586, %v691
    %693 = vmatmul.f32.gmra.mxu0 %v618
    %v694 = vpop.f32.mrf.mxu0
    %v695 = vadd.f32 %v586, %v694
    %696 = vmatmul.f32.gmra.mxu0 %v621
    %v697 = vpop.f32.mrf.mxu0
    %v698 = vadd.f32 %v586, %v697
    %699 = vmatmul.f32.gmra.mxu0 %v624
    %v700 = vpop.f32.mrf.mxu0
    %v701 = vadd.f32 %v586, %v700
    %702 = vmatmul.f32.gmra.mxu0 %v627
    %v703 = vpop.f32.mrf.mxu0
    %v704 = vadd.f32 %v586, %v703
    %705 = vmatmul.f32.gmra.mxu0 %v630
    %v706 = vpop.f32.mrf.mxu0
    %v707 = vadd.f32 %v586, %v706
    %708 = vmatmul.f32.gmra.mxu0 %v633
    %v709 = vpop.f32.mrf.mxu0
    %v710 = vadd.f32 %v586, %v709
    %711 = vdwg.mxu0
    %v712 = vsel %vm169, %v665, 0.0
    %713 = vadd.xlane.f32.xlu0 %v712
    %v714 = vpop.xlane.xlu0 %713
    %v715 = vsel %vm169, %v668, 0.0
    %716 = vadd.xlane.f32.xlu0 %v715
    %v717 = vpop.xlane.xlu0 %716
    %v718 = vsel %vm169, %v671, 0.0
    %719 = vadd.xlane.f32.xlu0 %v718
    %v720 = vpop.xlane.xlu0 %719
    %v721 = vsel %vm169, %v674, 0.0
    %722 = vadd.xlane.f32.xlu0 %v721
    %v723 = vpop.xlane.xlu0 %722
    %v724 = vsel %vm169, %v677, 0.0
    %725 = vadd.xlane.f32.xlu0 %v724
    %v726 = vpop.xlane.xlu0 %725
    %v727 = vsel %vm169, %v680, 0.0
    %728 = vadd.xlane.f32.xlu0 %v727
    %v729 = vpop.xlane.xlu0 %728
    %v730 = vsel %vm169, %v683, 0.0
    %731 = vadd.xlane.f32.xlu0 %v730
    %v732 = vpop.xlane.xlu0 %731
    %v733 = vsel %vm169, %v686, 0.0
    %734 = vadd.xlane.f32.xlu0 %v733
    %v735 = vpop.xlane.xlu0 %734
    %v736 = vsel %vm169, %v689, 0.0
    %737 = vadd.xlane.f32.xlu0 %v736
    %v738 = vpop.xlane.xlu0 %737
    %v739 = vsel %vm169, %v692, 0.0
    %740 = vadd.xlane.f32.xlu0 %v739
    %v741 = vpop.xlane.xlu0 %740
    %v742 = vsel %vm169, %v695, 0.0
    %743 = vadd.xlane.f32.xlu0 %v742
    %v744 = vpop.xlane.xlu0 %743
    %v745 = vsel %vm169, %v698, 0.0
    %746 = vadd.xlane.f32.xlu0 %v745
    %v747 = vpop.xlane.xlu0 %746
    %v748 = vsel %vm169, %v701, 0.0
    %749 = vadd.xlane.f32.xlu0 %v748
    %v750 = vpop.xlane.xlu0 %749
    %v751 = vsel %vm169, %v704, 0.0
    %752 = vadd.xlane.f32.xlu0 %v751
    %v753 = vpop.xlane.xlu0 %752
    %v754 = vsel %vm169, %v707, 0.0
    %755 = vadd.xlane.f32.xlu0 %v754
    %v756 = vpop.xlane.xlu0 %755
    %v757 = vsel %vm169, %v710, 0.0
    %758 = vadd.xlane.f32.xlu0 %v757
    %v759 = vpop.xlane.xlu0 %758
    %v760 = vmul.f32 %v714, %v224
    %v761 = vmul.f32 %v717, %v224
    %v762 = vmul.f32 %v720, %v224
    %v763 = vmul.f32 %v723, %v224
    %v764 = vmul.f32 %v726, %v224
    %v765 = vmul.f32 %v729, %v224
    %v766 = vmul.f32 %v732, %v224
    %v767 = vmul.f32 %v735, %v224
    %v768 = vmul.f32 %v738, %v224
    %v769 = vmul.f32 %v741, %v224
    %v770 = vmul.f32 %v744, %v224
    %v771 = vmul.f32 %v747, %v224
    %v772 = vmul.f32 %v750, %v224
    %v773 = vmul.f32 %v753, %v224
    %v774 = vmul.f32 %v756, %v224
    %v775 = vmul.f32 %v759, %v224
    %v776 = vsub.f32 %v665, %v760
    %v777 = vsub.f32 %v668, %v761
    %v778 = vsub.f32 %v671, %v762
    %v779 = vsub.f32 %v674, %v763
    %v780 = vsub.f32 %v677, %v764
    %v781 = vsub.f32 %v680, %v765
    %v782 = vsub.f32 %v683, %v766
    %v783 = vsub.f32 %v686, %v767
    %v784 = vsub.f32 %v689, %v768
    %v785 = vsub.f32 %v692, %v769
    %v786 = vsub.f32 %v695, %v770
    %v787 = vsub.f32 %v698, %v771
    %v788 = vsub.f32 %v701, %v772
    %v789 = vsub.f32 %v704, %v773
    %v790 = vsub.f32 %v707, %v774
    %v791 = vsub.f32 %v710, %v775
    %v792 = vmul.f32 %v776, %v776
    %v793 = vmul.f32 %v777, %v777
    %v794 = vmul.f32 %v778, %v778
    %v795 = vmul.f32 %v779, %v779
    %v796 = vmul.f32 %v780, %v780
    %v797 = vmul.f32 %v781, %v781
    %v798 = vmul.f32 %v782, %v782
    %v799 = vmul.f32 %v783, %v783
    %v800 = vmul.f32 %v784, %v784
    %v801 = vmul.f32 %v785, %v785
    %v802 = vmul.f32 %v786, %v786
    %v803 = vmul.f32 %v787, %v787
    %v804 = vmul.f32 %v788, %v788
    %v805 = vmul.f32 %v789, %v789
    %v806 = vmul.f32 %v790, %v790
    %v807 = vmul.f32 %v791, %v791
    %v808 = vsel %vm169, %v792, 0.0
    %809 = vadd.xlane.f32.xlu0 %v808
    %v810 = vpop.xlane.xlu0 %809
    %v811 = vsel %vm169, %v793, 0.0
    %812 = vadd.xlane.f32.xlu0 %v811
    %v813 = vpop.xlane.xlu0 %812
    %v814 = vsel %vm169, %v794, 0.0
    %815 = vadd.xlane.f32.xlu0 %v814
    %v816 = vpop.xlane.xlu0 %815
    %v817 = vsel %vm169, %v795, 0.0
    %818 = vadd.xlane.f32.xlu0 %v817
    %v819 = vpop.xlane.xlu0 %818
    %v820 = vsel %vm169, %v796, 0.0
    %821 = vadd.xlane.f32.xlu0 %v820
    %v822 = vpop.xlane.xlu0 %821
    %v823 = vsel %vm169, %v797, 0.0
    %824 = vadd.xlane.f32.xlu0 %v823
    %v825 = vpop.xlane.xlu0 %824
    %v826 = vsel %vm169, %v798, 0.0
    %827 = vadd.xlane.f32.xlu0 %v826
    %v828 = vpop.xlane.xlu0 %827
    %v829 = vsel %vm169, %v799, 0.0
    %830 = vadd.xlane.f32.xlu0 %v829
    %v831 = vpop.xlane.xlu0 %830
    %v832 = vsel %vm169, %v800, 0.0
    %833 = vadd.xlane.f32.xlu0 %v832
    %v834 = vpop.xlane.xlu0 %833
    %v835 = vsel %vm169, %v801, 0.0
    %836 = vadd.xlane.f32.xlu0 %v835
    %v837 = vpop.xlane.xlu0 %836
    %v838 = vsel %vm169, %v802, 0.0
    %839 = vadd.xlane.f32.xlu0 %v838
    %v840 = vpop.xlane.xlu0 %839
    %v841 = vsel %vm169, %v803, 0.0
    %842 = vadd.xlane.f32.xlu0 %v841
    %v843 = vpop.xlane.xlu0 %842
    %v844 = vsel %vm169, %v804, 0.0
    %845 = vadd.xlane.f32.xlu0 %v844
    %v846 = vpop.xlane.xlu0 %845
    %v847 = vsel %vm169, %v805, 0.0
    %848 = vadd.xlane.f32.xlu0 %v847
    %v849 = vpop.xlane.xlu0 %848
    %v850 = vsel %vm169, %v806, 0.0
    %851 = vadd.xlane.f32.xlu0 %v850
    %v852 = vpop.xlane.xlu0 %851
    %v853 = vsel %vm169, %v807, 0.0
    %854 = vadd.xlane.f32.xlu0 %v853
    %v855 = vpop.xlane.xlu0 %854
    %v856 = vmul.f32 %v810, %v224
    %v857 = vmul.f32 %v813, %v224
    %v858 = vmul.f32 %v816, %v224
    %v859 = vmul.f32 %v819, %v224
    %v860 = vmul.f32 %v822, %v224
    %v861 = vmul.f32 %v825, %v224
    %v862 = vmul.f32 %v828, %v224
    %v863 = vmul.f32 %v831, %v224
    %v864 = vmul.f32 %v834, %v224
    %v865 = vmul.f32 %v837, %v224
    %v866 = vmul.f32 %v840, %v224
    %v867 = vmul.f32 %v843, %v224
    %v868 = vmul.f32 %v846, %v224
    %v869 = vmul.f32 %v849, %v224
    %v870 = vmul.f32 %v852, %v224
    %v871 = vmul.f32 %v855, %v224
    %v872 = vadd.f32 %v856, 1e-05
    %v873 = vadd.f32 %v857, 1e-05
    %v874 = vadd.f32 %v858, 1e-05
    %v875 = vadd.f32 %v859, 1e-05
    %v876 = vadd.f32 %v860, 1e-05
    %v877 = vadd.f32 %v861, 1e-05
    %v878 = vadd.f32 %v862, 1e-05
    %v879 = vadd.f32 %v863, 1e-05
    %v880 = vadd.f32 %v864, 1e-05
    %v881 = vadd.f32 %v865, 1e-05
    %v882 = vadd.f32 %v866, 1e-05
    %v883 = vadd.f32 %v867, 1e-05
    %v884 = vadd.f32 %v868, 1e-05
    %v885 = vadd.f32 %v869, 1e-05
    %v886 = vadd.f32 %v870, 1e-05
    %v887 = vadd.f32 %v871, 1e-05
    %v888 = vrsqrt.pop %v872
    %v889 = vmul.f32 %v888, %v872
    %v890 = vmul.f32 %v889, %v888
    %v891 = vmul.f32 0.5, %v890
    %v892 = vsub.f32 1.5, %v891
    %v893 = vmul.f32 %v888, %v892
    %vm894 = vweird.f32 %v872
    %vm895 = vweird.f32 %v888
    %vm896 = vmor %vm894, %vm895
    %v897 = vsel %vm896, %v888, %v893
    %v898 = vrsqrt.pop %v873
    %v899 = vmul.f32 %v898, %v873
    %v900 = vmul.f32 %v899, %v898
    %v901 = vmul.f32 0.5, %v900
    %v902 = vsub.f32 1.5, %v901
    %v903 = vmul.f32 %v898, %v902
    %vm904 = vweird.f32 %v873
    %vm905 = vweird.f32 %v898
    %vm906 = vmor %vm904, %vm905
    %v907 = vsel %vm906, %v898, %v903
    %v908 = vrsqrt.pop %v874
    %v909 = vmul.f32 %v908, %v874
    %v910 = vmul.f32 %v909, %v908
    %v911 = vmul.f32 0.5, %v910
    %v912 = vsub.f32 1.5, %v911
    %v913 = vmul.f32 %v908, %v912
    %vm914 = vweird.f32 %v874
    %vm915 = vweird.f32 %v908
    %vm916 = vmor %vm914, %vm915
    %v917 = vsel %vm916, %v908, %v913
    %v918 = vrsqrt.pop %v875
    %v919 = vmul.f32 %v918, %v875
    %v920 = vmul.f32 %v919, %v918
    %v921 = vmul.f32 0.5, %v920
    %v922 = vsub.f32 1.5, %v921
    %v923 = vmul.f32 %v918, %v922
    %vm924 = vweird.f32 %v875
    %vm925 = vweird.f32 %v918
    %vm926 = vmor %vm924, %vm925
    %v927 = vsel %vm926, %v918, %v923
    %v928 = vrsqrt.pop %v876
    %v929 = vmul.f32 %v928, %v876
    %v930 = vmul.f32 %v929, %v928
    %v931 = vmul.f32 0.5, %v930
    %v932 = vsub.f32 1.5, %v931
    %v933 = vmul.f32 %v928, %v932
    %vm934 = vweird.f32 %v876
    %vm935 = vweird.f32 %v928
    %vm936 = vmor %vm934, %vm935
    %v937 = vsel %vm936, %v928, %v933
    %v938 = vrsqrt.pop %v877
    %v939 = vmul.f32 %v938, %v877
    %v940 = vmul.f32 %v939, %v938
    %v941 = vmul.f32 0.5, %v940
    %v942 = vsub.f32 1.5, %v941
    %v943 = vmul.f32 %v938, %v942
    %vm944 = vweird.f32 %v877
    %vm945 = vweird.f32 %v938
    %vm946 = vmor %vm944, %vm945
    %v947 = vsel %vm946, %v938, %v943
    %v948 = vrsqrt.pop %v878
    %v949 = vmul.f32 %v948, %v878
    %v950 = vmul.f32 %v949, %v948
    %v951 = vmul.f32 0.5, %v950
    %v952 = vsub.f32 1.5, %v951
    %v953 = vmul.f32 %v948, %v952
    %vm954 = vweird.f32 %v878
    %vm955 = vweird.f32 %v948
    %vm956 = vmor %vm954, %vm955
    %v957 = vsel %vm956, %v948, %v953
    %v958 = vrsqrt.pop %v879
    %v959 = vmul.f32 %v958, %v879
    %v960 = vmul.f32 %v959, %v958
    %v961 = vmul.f32 0.5, %v960
    %v962 = vsub.f32 1.5, %v961
    %v963 = vmul.f32 %v958, %v962
    %vm964 = vweird.f32 %v879
    %vm965 = vweird.f32 %v958
    %vm966 = vmor %vm964, %vm965
    %v967 = vsel %vm966, %v958, %v963
    %v968 = vrsqrt.pop %v880
    %v969 = vmul.f32 %v968, %v880
    %v970 = vmul.f32 %v969, %v968
    %v971 = vmul.f32 0.5, %v970
    %v972 = vsub.f32 1.5, %v971
    %v973 = vmul.f32 %v968, %v972
    %vm974 = vweird.f32 %v880
    %vm975 = vweird.f32 %v968
    %vm976 = vmor %vm974, %vm975
    %v977 = vsel %vm976, %v968, %v973
    %v978 = vrsqrt.pop %v881
    %v979 = vmul.f32 %v978, %v881
    %v980 = vmul.f32 %v979, %v978
    %v981 = vmul.f32 0.5, %v980
    %v982 = vsub.f32 1.5, %v981
    %v983 = vmul.f32 %v978, %v982
    %vm984 = vweird.f32 %v881
    %vm985 = vweird.f32 %v978
    %vm986 = vmor %vm984, %vm985
    %v987 = vsel %vm986, %v978, %v983
    %v988 = vrsqrt.pop %v882
    %v989 = vmul.f32 %v988, %v882
    %v990 = vmul.f32 %v989, %v988
    %v991 = vmul.f32 0.5, %v990
    %v992 = vsub.f32 1.5, %v991
    %v993 = vmul.f32 %v988, %v992
    %vm994 = vweird.f32 %v882
    %vm995 = vweird.f32 %v988
    %vm996 = vmor %vm994, %vm995
    %v997 = vsel %vm996, %v988, %v993
    %v998 = vrsqrt.pop %v883
    %v999 = vmul.f32 %v998, %v883
    %v1000 = vmul.f32 %v999, %v998
    %v1001 = vmul.f32 0.5, %v1000
    %v1002 = vsub.f32 1.5, %v1001
    %v1003 = vmul.f32 %v998, %v1002
    %vm1004 = vweird.f32 %v883
    %vm1005 = vweird.f32 %v998
    %vm1006 = vmor %vm1004, %vm1005
    %v1007 = vsel %vm1006, %v998, %v1003
    %v1008 = vrsqrt.pop %v884
    %v1009 = vmul.f32 %v1008, %v884
    %v1010 = vmul.f32 %v1009, %v1008
    %v1011 = vmul.f32 0.5, %v1010
    %v1012 = vsub.f32 1.5, %v1011
    %v1013 = vmul.f32 %v1008, %v1012
    %vm1014 = vweird.f32 %v884
    %vm1015 = vweird.f32 %v1008
    %vm1016 = vmor %vm1014, %vm1015
    %v1017 = vsel %vm1016, %v1008, %v1013
    %v1018 = vrsqrt.pop %v885
    %v1019 = vmul.f32 %v1018, %v885
    %v1020 = vmul.f32 %v1019, %v1018
    %v1021 = vmul.f32 0.5, %v1020
    %v1022 = vsub.f32 1.5, %v1021
    %v1023 = vmul.f32 %v1018, %v1022
    %vm1024 = vweird.f32 %v885
    %vm1025 = vweird.f32 %v1018
    %vm1026 = vmor %vm1024, %vm1025
    %v1027 = vsel %vm1026, %v1018, %v1023
    %v1028 = vrsqrt.pop %v886
    %v1029 = vmul.f32 %v1028, %v886
    %v1030 = vmul.f32 %v1029, %v1028
    %v1031 = vmul.f32 0.5, %v1030
    %v1032 = vsub.f32 1.5, %v1031
    %v1033 = vmul.f32 %v1028, %v1032
    %vm1034 = vweird.f32 %v886
    %vm1035 = vweird.f32 %v1028
    %vm1036 = vmor %vm1034, %vm1035
    %v1037 = vsel %vm1036, %v1028, %v1033
    %v1038 = vrsqrt.pop %v887
    %v1039 = vmul.f32 %v1038, %v887
    %v1040 = vmul.f32 %v1039, %v1038
    %v1041 = vmul.f32 0.5, %v1040
    %v1042 = vsub.f32 1.5, %v1041
    %v1043 = vmul.f32 %v1038, %v1042
    %vm1044 = vweird.f32 %v887
    %vm1045 = vweird.f32 %v1038
    %vm1046 = vmor %vm1044, %vm1045
    %v1047 = vsel %vm1046, %v1038, %v1043
    %v1048 = vmul.f32 %v776, %v897
    %v1049 = vmul.f32 %v777, %v907
    %v1050 = vmul.f32 %v778, %v917
    %v1051 = vmul.f32 %v779, %v927
    %v1052 = vmul.f32 %v780, %v937
    %v1053 = vmul.f32 %v781, %v947
    %v1054 = vmul.f32 %v782, %v957
    %v1055 = vmul.f32 %v783, %v967
    %v1056 = vmul.f32 %v784, %v977
    %v1057 = vmul.f32 %v785, %v987
    %v1058 = vmul.f32 %v786, %v997
    %v1059 = vmul.f32 %v787, %v1007
    %v1060 = vmul.f32 %v788, %v1017
    %v1061 = vmul.f32 %v789, %v1027
    %v1062 = vmul.f32 %v790, %v1037
    %v1063 = vmul.f32 %v791, %v1047
    %v1064 = vld [vmem:[%s4 + $0x4] sm:$0x1]
    %v1065 = vperm.slane %v1064, 0
    %v1066 = vmul.f32 %v1048, %v1065
    %v1067 = vmul.f32 %v1049, %v1065
    %v1068 = vmul.f32 %v1050, %v1065
    %v1069 = vmul.f32 %v1051, %v1065
    %v1070 = vmul.f32 %v1052, %v1065
    %v1071 = vmul.f32 %v1053, %v1065
    %v1072 = vmul.f32 %v1054, %v1065
    %v1073 = vmul.f32 %v1055, %v1065
    %v1074 = vmul.f32 %v1056, %v1065
    %v1075 = vmul.f32 %v1057, %v1065
    %v1076 = vmul.f32 %v1058, %v1065
    %v1077 = vmul.f32 %v1059, %v1065
    %v1078 = vmul.f32 %v1060, %v1065
    %v1079 = vmul.f32 %v1061, %v1065
    %v1080 = vmul.f32 %v1062, %v1065
    %v1081 = vmul.f32 %v1063, %v1065
    %v1082 = vld [vmem:[%s4 + $0x5] sm:$0x1]
    %v1083 = vperm.slane %v1082, 0
    %v1084 = vadd.f32 %v1066, %v1083
    %v1085 = vadd.f32 %v1067, %v1083
    %v1086 = vadd.f32 %v1068, %v1083
    %v1087 = vadd.f32 %v1069, %v1083
    %v1088 = vadd.f32 %v1070, %v1083
    %v1089 = vadd.f32 %v1071, %v1083
    %v1090 = vadd.f32 %v1072, %v1083
    %v1091 = vadd.f32 %v1073, %v1083
    %v1092 = vadd.f32 %v1074, %v1083
    %v1093 = vadd.f32 %v1075, %v1083
    %v1094 = vadd.f32 %v1076, %v1083
    %v1095 = vadd.f32 %v1077, %v1083
    %v1096 = vadd.f32 %v1078, %v1083
    %v1097 = vadd.f32 %v1079, %v1083
    %v1098 = vadd.f32 %v1080, %v1083
    %v1099 = vadd.f32 %v1081, %v1083
    %v1100 = vmax.f32 %v1084, 0.0
    %v1101 = vmax.f32 %v1085, 0.0
    %v1102 = vmax.f32 %v1086, 0.0
    %v1103 = vmax.f32 %v1087, 0.0
    %v1104 = vmax.f32 %v1088, 0.0
    %v1105 = vmax.f32 %v1089, 0.0
    %v1106 = vmax.f32 %v1090, 0.0
    %v1107 = vmax.f32 %v1091, 0.0
    %v1108 = vmax.f32 %v1092, 0.0
    %v1109 = vmax.f32 %v1093, 0.0
    %v1110 = vmax.f32 %v1094, 0.0
    %v1111 = vmax.f32 %v1095, 0.0
    %v1112 = vmax.f32 %v1096, 0.0
    %v1113 = vmax.f32 %v1097, 0.0
    %v1114 = vmax.f32 %v1098, 0.0
    %v1115 = vmax.f32 %v1099, 0.0
    %v1116 = vld [vmem:[%s3] sm:$0xff]
    %v1117 = vld [vmem:[%s3 + $0x8] sm:$0xff]
    %v1118 = vld [vmem:[%s3 + $0x10] sm:$0xff]
    %v1119 = vld [vmem:[%s3 + $0x18] sm:$0xff]
    %v1120 = vld [vmem:[%s4 + $0x6] sm:$0x1]
    %v1121 = vperm.slane %v1120, 0
    %v1123 = vsel %vm169, %v1100, 0
    %v1126 = vsel %vm169, %v1101, 0
    %v1129 = vsel %vm169, %v1102, 0
    %v1132 = vsel %vm169, %v1103, 0
    %v1135 = vsel %vm169, %v1104, 0
    %v1138 = vsel %vm169, %v1105, 0
    %v1141 = vsel %vm169, %v1106, 0
    %v1144 = vsel %vm169, %v1107, 0
    %v1147 = vsel %vm169, %v1108, 0
    %v1150 = vsel %vm169, %v1109, 0
    %v1153 = vsel %vm169, %v1110, 0
    %v1156 = vsel %vm169, %v1111, 0
    %v1159 = vsel %vm169, %v1112, 0
    %v1162 = vsel %vm169, %v1113, 0
    %v1165 = vsel %vm169, %v1114, 0
    %v1168 = vsel %vm169, %v1115, 0
    %v1171 = vsel %vm169, %v1116, 0
    %v1174 = vsel %vm169, %v1117, 0
    %v1177 = vsel %vm169, %v1118, 0
    %v1180 = vsel %vm169, %v1119, 0
    %1182 = vmatpush.xpose.msra.mxu0 0.0
    %1183 = vmatpush.xpose.msra.mxu0 0.0
    %1184 = vmatpush.xpose.msra.mxu0 0.0
    %1185 = vmatpush.xpose.msra.mxu0 0.0
    %1186 = vmatpush.xpose.msra.mxu0 0.0
    %1187 = vmatpush.xpose.msra.mxu0 0.0
    %1188 = vmatpush.xpose.msra.mxu0 0.0
    %1189 = vmatpush.xpose.msra.mxu0 0.0
    %1190 = vmatpush.xpose.msra.mxu0 0.0
    %1191 = vmatpush.xpose.msra.mxu0 0.0
    %1192 = vmatpush.xpose.msra.mxu0 0.0
    %1193 = vmatpush.xpose.msra.mxu0 0.0
    %1194 = vmatpush.xpose.msra.mxu0 %v1180
    %1195 = vmatpush.xpose.msra.mxu0 %v1177
    %1196 = vmatpush.xpose.msra.mxu0 %v1174
    %1197 = vmatpush.xpose.msra.mxu0 %v1171
    %1198 = vmatmul.f32.gmra.mxu0 %v1123
    %v1199 = vpop.f32.mrf.mxu0
    %v1200 = vadd.f32 %v1121, %v1199
    %1201 = vmatmul.f32.gmra.mxu0 %v1126
    %v1202 = vpop.f32.mrf.mxu0
    %v1203 = vadd.f32 %v1121, %v1202
    %1204 = vmatmul.f32.gmra.mxu0 %v1129
    %v1205 = vpop.f32.mrf.mxu0
    %v1206 = vadd.f32 %v1121, %v1205
    %1207 = vmatmul.f32.gmra.mxu0 %v1132
    %v1208 = vpop.f32.mrf.mxu0
    %v1209 = vadd.f32 %v1121, %v1208
    %1210 = vmatmul.f32.gmra.mxu0 %v1135
    %v1211 = vpop.f32.mrf.mxu0
    %v1212 = vadd.f32 %v1121, %v1211
    %1213 = vmatmul.f32.gmra.mxu0 %v1138
    %v1214 = vpop.f32.mrf.mxu0
    %v1215 = vadd.f32 %v1121, %v1214
    %1216 = vmatmul.f32.gmra.mxu0 %v1141
    %v1217 = vpop.f32.mrf.mxu0
    %v1218 = vadd.f32 %v1121, %v1217
    %1219 = vmatmul.f32.gmra.mxu0 %v1144
    %v1220 = vpop.f32.mrf.mxu0
    %v1221 = vadd.f32 %v1121, %v1220
    %1222 = vmatmul.f32.gmra.mxu0 %v1147
    %v1223 = vpop.f32.mrf.mxu0
    %v1224 = vadd.f32 %v1121, %v1223
    %1225 = vmatmul.f32.gmra.mxu0 %v1150
    %v1226 = vpop.f32.mrf.mxu0
    %v1227 = vadd.f32 %v1121, %v1226
    %1228 = vmatmul.f32.gmra.mxu0 %v1153
    %v1229 = vpop.f32.mrf.mxu0
    %v1230 = vadd.f32 %v1121, %v1229
    %1231 = vmatmul.f32.gmra.mxu0 %v1156
    %v1232 = vpop.f32.mrf.mxu0
    %v1233 = vadd.f32 %v1121, %v1232
    %1234 = vmatmul.f32.gmra.mxu0 %v1159
    %v1235 = vpop.f32.mrf.mxu0
    %v1236 = vadd.f32 %v1121, %v1235
    %1237 = vmatmul.f32.gmra.mxu0 %v1162
    %v1238 = vpop.f32.mrf.mxu0
    %v1239 = vadd.f32 %v1121, %v1238
    %1240 = vmatmul.f32.gmra.mxu0 %v1165
    %v1241 = vpop.f32.mrf.mxu0
    %v1242 = vadd.f32 %v1121, %v1241
    %1243 = vmatmul.f32.gmra.mxu0 %v1168
    %v1244 = vpop.f32.mrf.mxu0
    %v1245 = vadd.f32 %v1121, %v1244
    %1246 = vdwg.mxu0
    %v1247 = vsel %vm169, %v1200, 0.0
    %1248 = vadd.xlane.f32.xlu0 %v1247
    %v1249 = vpop.xlane.xlu0 %1248
    %v1250 = vsel %vm169, %v1203, 0.0
    %1251 = vadd.xlane.f32.xlu0 %v1250
    %v1252 = vpop.xlane.xlu0 %1251
    %v1253 = vsel %vm169, %v1206, 0.0
    %1254 = vadd.xlane.f32.xlu0 %v1253
    %v1255 = vpop.xlane.xlu0 %1254
    %v1256 = vsel %vm169, %v1209, 0.0
    %1257 = vadd.xlane.f32.xlu0 %v1256
    %v1258 = vpop.xlane.xlu0 %1257
    %v1259 = vsel %vm169, %v1212, 0.0
    %1260 = vadd.xlane.f32.xlu0 %v1259
    %v1261 = vpop.xlane.xlu0 %1260
    %v1262 = vsel %vm169, %v1215, 0.0
    %1263 = vadd.xlane.f32.xlu0 %v1262
    %v1264 = vpop.xlane.xlu0 %1263
    %v1265 = vsel %vm169, %v1218, 0.0
    %1266 = vadd.xlane.f32.xlu0 %v1265
    %v1267 = vpop.xlane.xlu0 %1266
    %v1268 = vsel %vm169, %v1221, 0.0
    %1269 = vadd.xlane.f32.xlu0 %v1268
    %v1270 = vpop.xlane.xlu0 %1269
    %v1271 = vsel %vm169, %v1224, 0.0
    %1272 = vadd.xlane.f32.xlu0 %v1271
    %v1273 = vpop.xlane.xlu0 %1272
    %v1274 = vsel %vm169, %v1227, 0.0
    %1275 = vadd.xlane.f32.xlu0 %v1274
    %v1276 = vpop.xlane.xlu0 %1275
    %v1277 = vsel %vm169, %v1230, 0.0
    %1278 = vadd.xlane.f32.xlu0 %v1277
    %v1279 = vpop.xlane.xlu0 %1278
    %v1280 = vsel %vm169, %v1233, 0.0
    %1281 = vadd.xlane.f32.xlu0 %v1280
    %v1282 = vpop.xlane.xlu0 %1281
    %v1283 = vsel %vm169, %v1236, 0.0
    %1284 = vadd.xlane.f32.xlu0 %v1283
    %v1285 = vpop.xlane.xlu0 %1284
    %v1286 = vsel %vm169, %v1239, 0.0
    %1287 = vadd.xlane.f32.xlu0 %v1286
    %v1288 = vpop.xlane.xlu0 %1287
    %v1289 = vsel %vm169, %v1242, 0.0
    %1290 = vadd.xlane.f32.xlu0 %v1289
    %v1291 = vpop.xlane.xlu0 %1290
    %v1292 = vsel %vm169, %v1245, 0.0
    %1293 = vadd.xlane.f32.xlu0 %v1292
    %v1294 = vpop.xlane.xlu0 %1293
    %v1295 = vmul.f32 %v1249, %v224
    %v1296 = vmul.f32 %v1252, %v224
    %v1297 = vmul.f32 %v1255, %v224
    %v1298 = vmul.f32 %v1258, %v224
    %v1299 = vmul.f32 %v1261, %v224
    %v1300 = vmul.f32 %v1264, %v224
    %v1301 = vmul.f32 %v1267, %v224
    %v1302 = vmul.f32 %v1270, %v224
    %v1303 = vmul.f32 %v1273, %v224
    %v1304 = vmul.f32 %v1276, %v224
    %v1305 = vmul.f32 %v1279, %v224
    %v1306 = vmul.f32 %v1282, %v224
    %v1307 = vmul.f32 %v1285, %v224
    %v1308 = vmul.f32 %v1288, %v224
    %v1309 = vmul.f32 %v1291, %v224
    %v1310 = vmul.f32 %v1294, %v224
    %v1311 = vsub.f32 %v1200, %v1295
    %v1312 = vsub.f32 %v1203, %v1296
    %v1313 = vsub.f32 %v1206, %v1297
    %v1314 = vsub.f32 %v1209, %v1298
    %v1315 = vsub.f32 %v1212, %v1299
    %v1316 = vsub.f32 %v1215, %v1300
    %v1317 = vsub.f32 %v1218, %v1301
    %v1318 = vsub.f32 %v1221, %v1302
    %v1319 = vsub.f32 %v1224, %v1303
    %v1320 = vsub.f32 %v1227, %v1304
    %v1321 = vsub.f32 %v1230, %v1305
    %v1322 = vsub.f32 %v1233, %v1306
    %v1323 = vsub.f32 %v1236, %v1307
    %v1324 = vsub.f32 %v1239, %v1308
    %v1325 = vsub.f32 %v1242, %v1309
    %v1326 = vsub.f32 %v1245, %v1310
    %v1327 = vmul.f32 %v1311, %v1311
    %v1328 = vmul.f32 %v1312, %v1312
    %v1329 = vmul.f32 %v1313, %v1313
    %v1330 = vmul.f32 %v1314, %v1314
    %v1331 = vmul.f32 %v1315, %v1315
    %v1332 = vmul.f32 %v1316, %v1316
    %v1333 = vmul.f32 %v1317, %v1317
    %v1334 = vmul.f32 %v1318, %v1318
    %v1335 = vmul.f32 %v1319, %v1319
    %v1336 = vmul.f32 %v1320, %v1320
    %v1337 = vmul.f32 %v1321, %v1321
    %v1338 = vmul.f32 %v1322, %v1322
    %v1339 = vmul.f32 %v1323, %v1323
    %v1340 = vmul.f32 %v1324, %v1324
    %v1341 = vmul.f32 %v1325, %v1325
    %v1342 = vmul.f32 %v1326, %v1326
    %v1343 = vsel %vm169, %v1327, 0.0
    %1344 = vadd.xlane.f32.xlu0 %v1343
    %v1345 = vpop.xlane.xlu0 %1344
    %v1346 = vsel %vm169, %v1328, 0.0
    %1347 = vadd.xlane.f32.xlu0 %v1346
    %v1348 = vpop.xlane.xlu0 %1347
    %v1349 = vsel %vm169, %v1329, 0.0
    %1350 = vadd.xlane.f32.xlu0 %v1349
    %v1351 = vpop.xlane.xlu0 %1350
    %v1352 = vsel %vm169, %v1330, 0.0
    %1353 = vadd.xlane.f32.xlu0 %v1352
    %v1354 = vpop.xlane.xlu0 %1353
    %v1355 = vsel %vm169, %v1331, 0.0
    %1356 = vadd.xlane.f32.xlu0 %v1355
    %v1357 = vpop.xlane.xlu0 %1356
    %v1358 = vsel %vm169, %v1332, 0.0
    %1359 = vadd.xlane.f32.xlu0 %v1358
    %v1360 = vpop.xlane.xlu0 %1359
    %v1361 = vsel %vm169, %v1333, 0.0
    %1362 = vadd.xlane.f32.xlu0 %v1361
    %v1363 = vpop.xlane.xlu0 %1362
    %v1364 = vsel %vm169, %v1334, 0.0
    %1365 = vadd.xlane.f32.xlu0 %v1364
    %v1366 = vpop.xlane.xlu0 %1365
    %v1367 = vsel %vm169, %v1335, 0.0
    %1368 = vadd.xlane.f32.xlu0 %v1367
    %v1369 = vpop.xlane.xlu0 %1368
    %v1370 = vsel %vm169, %v1336, 0.0
    %1371 = vadd.xlane.f32.xlu0 %v1370
    %v1372 = vpop.xlane.xlu0 %1371
    %v1373 = vsel %vm169, %v1337, 0.0
    %1374 = vadd.xlane.f32.xlu0 %v1373
    %v1375 = vpop.xlane.xlu0 %1374
    %v1376 = vsel %vm169, %v1338, 0.0
    %1377 = vadd.xlane.f32.xlu0 %v1376
    %v1378 = vpop.xlane.xlu0 %1377
    %v1379 = vsel %vm169, %v1339, 0.0
    %1380 = vadd.xlane.f32.xlu0 %v1379
    %v1381 = vpop.xlane.xlu0 %1380
    %v1382 = vsel %vm169, %v1340, 0.0
    %1383 = vadd.xlane.f32.xlu0 %v1382
    %v1384 = vpop.xlane.xlu0 %1383
    %v1385 = vsel %vm169, %v1341, 0.0
    %1386 = vadd.xlane.f32.xlu0 %v1385
    %v1387 = vpop.xlane.xlu0 %1386
    %v1388 = vsel %vm169, %v1342, 0.0
    %1389 = vadd.xlane.f32.xlu0 %v1388
    %v1390 = vpop.xlane.xlu0 %1389
    %v1391 = vmul.f32 %v1345, %v224
    %v1392 = vmul.f32 %v1348, %v224
    %v1393 = vmul.f32 %v1351, %v224
    %v1394 = vmul.f32 %v1354, %v224
    %v1395 = vmul.f32 %v1357, %v224
    %v1396 = vmul.f32 %v1360, %v224
    %v1397 = vmul.f32 %v1363, %v224
    %v1398 = vmul.f32 %v1366, %v224
    %v1399 = vmul.f32 %v1369, %v224
    %v1400 = vmul.f32 %v1372, %v224
    %v1401 = vmul.f32 %v1375, %v224
    %v1402 = vmul.f32 %v1378, %v224
    %v1403 = vmul.f32 %v1381, %v224
    %v1404 = vmul.f32 %v1384, %v224
    %v1405 = vmul.f32 %v1387, %v224
    %v1406 = vmul.f32 %v1390, %v224
    %v1407 = vadd.f32 %v1391, 1e-05
    %v1408 = vadd.f32 %v1392, 1e-05
    %v1409 = vadd.f32 %v1393, 1e-05
    %v1410 = vadd.f32 %v1394, 1e-05
    %v1411 = vadd.f32 %v1395, 1e-05
    %v1412 = vadd.f32 %v1396, 1e-05
    %v1413 = vadd.f32 %v1397, 1e-05
    %v1414 = vadd.f32 %v1398, 1e-05
    %v1415 = vadd.f32 %v1399, 1e-05
    %v1416 = vadd.f32 %v1400, 1e-05
    %v1417 = vadd.f32 %v1401, 1e-05
    %v1418 = vadd.f32 %v1402, 1e-05
    %v1419 = vadd.f32 %v1403, 1e-05
    %v1420 = vadd.f32 %v1404, 1e-05
    %v1421 = vadd.f32 %v1405, 1e-05
    %v1422 = vadd.f32 %v1406, 1e-05
    %v1423 = vrsqrt.pop %v1407
    %v1424 = vmul.f32 %v1423, %v1407
    %v1425 = vmul.f32 %v1424, %v1423
    %v1426 = vmul.f32 0.5, %v1425
    %v1427 = vsub.f32 1.5, %v1426
    %v1428 = vmul.f32 %v1423, %v1427
    %vm1429 = vweird.f32 %v1407
    %vm1430 = vweird.f32 %v1423
    %vm1431 = vmor %vm1429, %vm1430
    %v1432 = vsel %vm1431, %v1423, %v1428
    %v1433 = vrsqrt.pop %v1408
    %v1434 = vmul.f32 %v1433, %v1408
    %v1435 = vmul.f32 %v1434, %v1433
    %v1436 = vmul.f32 0.5, %v1435
    %v1437 = vsub.f32 1.5, %v1436
    %v1438 = vmul.f32 %v1433, %v1437
    %vm1439 = vweird.f32 %v1408
    %vm1440 = vweird.f32 %v1433
    %vm1441 = vmor %vm1439, %vm1440
    %v1442 = vsel %vm1441, %v1433, %v1438
    %v1443 = vrsqrt.pop %v1409
    %v1444 = vmul.f32 %v1443, %v1409
    %v1445 = vmul.f32 %v1444, %v1443
    %v1446 = vmul.f32 0.5, %v1445
    %v1447 = vsub.f32 1.5, %v1446
    %v1448 = vmul.f32 %v1443, %v1447
    %vm1449 = vweird.f32 %v1409
    %vm1450 = vweird.f32 %v1443
    %vm1451 = vmor %vm1449, %vm1450
    %v1452 = vsel %vm1451, %v1443, %v1448
    %v1453 = vrsqrt.pop %v1410
    %v1454 = vmul.f32 %v1453, %v1410
    %v1455 = vmul.f32 %v1454, %v1453
    %v1456 = vmul.f32 0.5, %v1455
    %v1457 = vsub.f32 1.5, %v1456
    %v1458 = vmul.f32 %v1453, %v1457
    %vm1459 = vweird.f32 %v1410
    %vm1460 = vweird.f32 %v1453
    %vm1461 = vmor %vm1459, %vm1460
    %v1462 = vsel %vm1461, %v1453, %v1458
    %v1463 = vrsqrt.pop %v1411
    %v1464 = vmul.f32 %v1463, %v1411
    %v1465 = vmul.f32 %v1464, %v1463
    %v1466 = vmul.f32 0.5, %v1465
    %v1467 = vsub.f32 1.5, %v1466
    %v1468 = vmul.f32 %v1463, %v1467
    %vm1469 = vweird.f32 %v1411
    %vm1470 = vweird.f32 %v1463
    %vm1471 = vmor %vm1469, %vm1470
    %v1472 = vsel %vm1471, %v1463, %v1468
    %v1473 = vrsqrt.pop %v1412
    %v1474 = vmul.f32 %v1473, %v1412
    %v1475 = vmul.f32 %v1474, %v1473
    %v1476 = vmul.f32 0.5, %v1475
    %v1477 = vsub.f32 1.5, %v1476
    %v1478 = vmul.f32 %v1473, %v1477
    %vm1479 = vweird.f32 %v1412
    %vm1480 = vweird.f32 %v1473
    %vm1481 = vmor %vm1479, %vm1480
    %v1482 = vsel %vm1481, %v1473, %v1478
    %v1483 = vrsqrt.pop %v1413
    %v1484 = vmul.f32 %v1483, %v1413
    %v1485 = vmul.f32 %v1484, %v1483
    %v1486 = vmul.f32 0.5, %v1485
    %v1487 = vsub.f32 1.5, %v1486
    %v1488 = vmul.f32 %v1483, %v1487
    %vm1489 = vweird.f32 %v1413
    %vm1490 = vweird.f32 %v1483
    %vm1491 = vmor %vm1489, %vm1490
    %v1492 = vsel %vm1491, %v1483, %v1488
    %v1493 = vrsqrt.pop %v1414
    %v1494 = vmul.f32 %v1493, %v1414
    %v1495 = vmul.f32 %v1494, %v1493
    %v1496 = vmul.f32 0.5, %v1495
    %v1497 = vsub.f32 1.5, %v1496
    %v1498 = vmul.f32 %v1493, %v1497
    %vm1499 = vweird.f32 %v1414
    %vm1500 = vweird.f32 %v1493
    %vm1501 = vmor %vm1499, %vm1500
    %v1502 = vsel %vm1501, %v1493, %v1498
    %v1503 = vrsqrt.pop %v1415
    %v1504 = vmul.f32 %v1503, %v1415
    %v1505 = vmul.f32 %v1504, %v1503
    %v1506 = vmul.f32 0.5, %v1505
    %v1507 = vsub.f32 1.5, %v1506
    %v1508 = vmul.f32 %v1503, %v1507
    %vm1509 = vweird.f32 %v1415
    %vm1510 = vweird.f32 %v1503
    %vm1511 = vmor %vm1509, %vm1510
    %v1512 = vsel %vm1511, %v1503, %v1508
    %v1513 = vrsqrt.pop %v1416
    %v1514 = vmul.f32 %v1513, %v1416
    %v1515 = vmul.f32 %v1514, %v1513
    %v1516 = vmul.f32 0.5, %v1515
    %v1517 = vsub.f32 1.5, %v1516
    %v1518 = vmul.f32 %v1513, %v1517
    %vm1519 = vweird.f32 %v1416
    %vm1520 = vweird.f32 %v1513
    %vm1521 = vmor %vm1519, %vm1520
    %v1522 = vsel %vm1521, %v1513, %v1518
    %v1523 = vrsqrt.pop %v1417
    %v1524 = vmul.f32 %v1523, %v1417
    %v1525 = vmul.f32 %v1524, %v1523
    %v1526 = vmul.f32 0.5, %v1525
    %v1527 = vsub.f32 1.5, %v1526
    %v1528 = vmul.f32 %v1523, %v1527
    %vm1529 = vweird.f32 %v1417
    %vm1530 = vweird.f32 %v1523
    %vm1531 = vmor %vm1529, %vm1530
    %v1532 = vsel %vm1531, %v1523, %v1528
    %v1533 = vrsqrt.pop %v1418
    %v1534 = vmul.f32 %v1533, %v1418
    %v1535 = vmul.f32 %v1534, %v1533
    %v1536 = vmul.f32 0.5, %v1535
    %v1537 = vsub.f32 1.5, %v1536
    %v1538 = vmul.f32 %v1533, %v1537
    %vm1539 = vweird.f32 %v1418
    %vm1540 = vweird.f32 %v1533
    %vm1541 = vmor %vm1539, %vm1540
    %v1542 = vsel %vm1541, %v1533, %v1538
    %v1543 = vrsqrt.pop %v1419
    %v1544 = vmul.f32 %v1543, %v1419
    %v1545 = vmul.f32 %v1544, %v1543
    %v1546 = vmul.f32 0.5, %v1545
    %v1547 = vsub.f32 1.5, %v1546
    %v1548 = vmul.f32 %v1543, %v1547
    %vm1549 = vweird.f32 %v1419
    %vm1550 = vweird.f32 %v1543
    %vm1551 = vmor %vm1549, %vm1550
    %v1552 = vsel %vm1551, %v1543, %v1548
    %v1553 = vrsqrt.pop %v1420
    %v1554 = vmul.f32 %v1553, %v1420
    %v1555 = vmul.f32 %v1554, %v1553
    %v1556 = vmul.f32 0.5, %v1555
    %v1557 = vsub.f32 1.5, %v1556
    %v1558 = vmul.f32 %v1553, %v1557
    %vm1559 = vweird.f32 %v1420
    %vm1560 = vweird.f32 %v1553
    %vm1561 = vmor %vm1559, %vm1560
    %v1562 = vsel %vm1561, %v1553, %v1558
    %v1563 = vrsqrt.pop %v1421
    %v1564 = vmul.f32 %v1563, %v1421
    %v1565 = vmul.f32 %v1564, %v1563
    %v1566 = vmul.f32 0.5, %v1565
    %v1567 = vsub.f32 1.5, %v1566
    %v1568 = vmul.f32 %v1563, %v1567
    %vm1569 = vweird.f32 %v1421
    %vm1570 = vweird.f32 %v1563
    %vm1571 = vmor %vm1569, %vm1570
    %v1572 = vsel %vm1571, %v1563, %v1568
    %v1573 = vrsqrt.pop %v1422
    %v1574 = vmul.f32 %v1573, %v1422
    %v1575 = vmul.f32 %v1574, %v1573
    %v1576 = vmul.f32 0.5, %v1575
    %v1577 = vsub.f32 1.5, %v1576
    %v1578 = vmul.f32 %v1573, %v1577
    %vm1579 = vweird.f32 %v1422
    %vm1580 = vweird.f32 %v1573
    %vm1581 = vmor %vm1579, %vm1580
    %v1582 = vsel %vm1581, %v1573, %v1578
    %v1583 = vmul.f32 %v1311, %v1432
    %v1584 = vmul.f32 %v1312, %v1442
    %v1585 = vmul.f32 %v1313, %v1452
    %v1586 = vmul.f32 %v1314, %v1462
    %v1587 = vmul.f32 %v1315, %v1472
    %v1588 = vmul.f32 %v1316, %v1482
    %v1589 = vmul.f32 %v1317, %v1492
    %v1590 = vmul.f32 %v1318, %v1502
    %v1591 = vmul.f32 %v1319, %v1512
    %v1592 = vmul.f32 %v1320, %v1522
    %v1593 = vmul.f32 %v1321, %v1532
    %v1594 = vmul.f32 %v1322, %v1542
    %v1595 = vmul.f32 %v1323, %v1552
    %v1596 = vmul.f32 %v1324, %v1562
    %v1597 = vmul.f32 %v1325, %v1572
    %v1598 = vmul.f32 %v1326, %v1582
    %v1599 = vld [vmem:[%s4 + $0x7] sm:$0x1]
    %v1600 = vperm.slane %v1599, 0
    %v1601 = vmul.f32 %v1583, %v1600
    %v1602 = vmul.f32 %v1584, %v1600
    %v1603 = vmul.f32 %v1585, %v1600
    %v1604 = vmul.f32 %v1586, %v1600
    %v1605 = vmul.f32 %v1587, %v1600
    %v1606 = vmul.f32 %v1588, %v1600
    %v1607 = vmul.f32 %v1589, %v1600
    %v1608 = vmul.f32 %v1590, %v1600
    %v1609 = vmul.f32 %v1591, %v1600
    %v1610 = vmul.f32 %v1592, %v1600
    %v1611 = vmul.f32 %v1593, %v1600
    %v1612 = vmul.f32 %v1594, %v1600
    %v1613 = vmul.f32 %v1595, %v1600
    %v1614 = vmul.f32 %v1596, %v1600
    %v1615 = vmul.f32 %v1597, %v1600
    %v1616 = vmul.f32 %v1598, %v1600
    %v1617 = vld [vmem:[%s4 + $0x8] sm:$0x1]
    %v1618 = vperm.slane %v1617, 0
    %v1619 = vadd.f32 %v1601, %v1618
    %v1620 = vadd.f32 %v1602, %v1618
    %v1621 = vadd.f32 %v1603, %v1618
    %v1622 = vadd.f32 %v1604, %v1618
    %v1623 = vadd.f32 %v1605, %v1618
    %v1624 = vadd.f32 %v1606, %v1618
    %v1625 = vadd.f32 %v1607, %v1618
    %v1626 = vadd.f32 %v1608, %v1618
    %v1627 = vadd.f32 %v1609, %v1618
    %v1628 = vadd.f32 %v1610, %v1618
    %v1629 = vadd.f32 %v1611, %v1618
    %v1630 = vadd.f32 %v1612, %v1618
    %v1631 = vadd.f32 %v1613, %v1618
    %v1632 = vadd.f32 %v1614, %v1618
    %v1633 = vadd.f32 %v1615, %v1618
    %v1634 = vadd.f32 %v1616, %v1618
    %1635 = vst.msk [vmem:[#allocation2] sm:$0xff] %vm169, %v1619
    %1636 = vst.msk [vmem:[#allocation2 + $0x8] sm:$0xff] %vm169, %v1620
    %1637 = vst.msk [vmem:[#allocation2 + $0x10] sm:$0xff] %vm169, %v1621
    %1638 = vst.msk [vmem:[#allocation2 + $0x18] sm:$0xff] %vm169, %v1622
    %1639 = vst.msk [vmem:[#allocation2 + $0x20] sm:$0xff] %vm169, %v1623
    %1640 = vst.msk [vmem:[#allocation2 + $0x28] sm:$0xff] %vm169, %v1624
    %1641 = vst.msk [vmem:[#allocation2 + $0x30] sm:$0xff] %vm169, %v1625
    %1642 = vst.msk [vmem:[#allocation2 + $0x38] sm:$0xff] %vm169, %v1626
    %1643 = vst.msk [vmem:[#allocation2 + $0x40] sm:$0xff] %vm169, %v1627
    %1644 = vst.msk [vmem:[#allocation2 + $0x48] sm:$0xff] %vm169, %v1628
    %1645 = vst.msk [vmem:[#allocation2 + $0x50] sm:$0xff] %vm169, %v1629
    %1646 = vst.msk [vmem:[#allocation2 + $0x58] sm:$0xff] %vm169, %v1630
    %1647 = vst.msk [vmem:[#allocation2 + $0x60] sm:$0xff] %vm169, %v1631
    %1648 = vst.msk [vmem:[#allocation2 + $0x68] sm:$0xff] %vm169, %v1632
    %1649 = vst.msk [vmem:[#allocation2 + $0x70] sm:$0xff] %vm169, %v1633
    %1650 = vst.msk [vmem:[#allocation2 + $0x78] sm:$0xff] %vm169, %v1634
    // Predicated region
    $region22: #{state_encoder.1} parent=1 // pred_check
      _
    $region23: #{state_encoder.1} parent=1 // pred_check_branch
      %1652 = sbr.rel (0) target = $region25
    $region24: #{state_encoder.1} parent=1 // pred_region
      %1654 = vsyncadd [#allocation3], 1792
      %s1655 = sshll.u32 [#allocation2], 4
      %s1656 = int_to_ptr.vmem [resolvable:$true] %s1655
      %s1657 = sshll.u32 %s5, 4
      %s1658 = int_to_ptr.hbm [resolvable:$true] %s1657
      %1663 = dma.vmem_to_hbm [thread:$0]  %s1656, 256, %s1658, [#allocation3], 128, 128, 8
    $region25: #{state_encoder.1} parent=1 // pred_fallthru
      _
    // Predicated region
    $region26: #{state_encoder.1} parent=1 // pred_check
      _
    $region27: #{state_encoder.1} parent=1 // pred_check_branch
      %1665 = sbr.rel (0) target = $region29
    $region28: #{state_encoder.1} parent=1 // pred_region
      %1667 = dma.done [#allocation3], 2048
    $region29: #{state_encoder.1} parent=1 // pred_fallthru
      _
    %1668 = vsyncpa [#allocation3], 1

</llo_original>
